<compile_context>
chip_gen: v7x
topology: tpu7x:2x2x1
jax: 0.10.0
libtpu: 0.0.40
codegen_flags: <defaults>
</compile_context>

<pallas_src>
import functools

import jax
import jax.numpy as jnp
import numpy as np
from jax.experimental import pallas as pl
from jax.experimental.pallas import tpu as pltpu

K = 3  # kernel_size (stride=1, padding=1)


# --------------------------------- kernel -----------------------------------
def conv_lstm_cell_kernel(x_ref, h_ref, c_ref, wt_ref, wg_ref, gb_ref,
                          h_out_ref, c_out_ref, *, img_h):
    # x_ref:  (R, W*Cin_pad)           input rows (R = batch_tile * img_h)
    # h_ref:  (R, W*Cout)              hidden-state rows
    # c_ref:  (R, W*Cout)              cell-state rows
    # wt_ref: (3*W*Cout, W*Cin_pad)    banded transform-conv weight (bf16)
    # wg_ref: (3*W*Cin_pad, 4*W*Cout)  banded fused gate-conv weight (bf16)
    # gb_ref: (R, 4*W*Cout)            per-row gate bias (b_transform folded in)
    R = x_ref.shape[0]
    WCout = h_ref.shape[1]

    # One iota/mask pair shared by all four vertical shifts.
    rows = jax.lax.broadcasted_iota(jnp.int32, (R, 1), 0) % img_h
    top = rows == 0
    bot = rows == img_h - 1

    def taps(a):
        # Stack the 3 vertical taps along the lane (contraction) axis:
        # [a[r-1], a[r], a[r+1]] with zeros across image boundaries.
        up = jnp.where(top, 0.0, pltpu.roll(a, shift=1, axis=0))
        dn = jnp.where(bot, 0.0, pltpu.roll(a, shift=R - 1, axis=0))
        return jnp.concatenate([up, a, dn], axis=1)

    x = x_ref[...]
    hid = h_ref[...]
    c_old = c_ref[...]

    # transform conv: single (R, 3*W*Cout) x (3*W*Cout, W*Cin_pad) matmul.
    t = x + jnp.dot(taps(hid).astype(jnp.bfloat16), wt_ref[...],
                    preferred_element_type=jnp.float32)

    # fused forget/input/output/state conv:
    # single (R, 3*W*Cin_pad) x (3*W*Cin_pad, 4*W*Cout) matmul.
    gates = jnp.dot(taps(t).astype(jnp.bfloat16), wg_ref[...],
                    preferred_element_type=jnp.float32) + gb_ref[...]

    f_gate = jax.nn.sigmoid(gates[:, 0 * WCout:1 * WCout])
    i_gate = jax.nn.sigmoid(gates[:, 1 * WCout:2 * WCout])
    o_gate = jax.nn.sigmoid(gates[:, 2 * WCout:3 * WCout])
    s_gate = jnp.tanh(gates[:, 3 * WCout:4 * WCout])

    c_new = f_gate * c_old + i_gate * s_gate
    h_new = o_gate * jnp.tanh(c_new)

    c_out_ref[...] = c_new.astype(c_out_ref.dtype)
    h_out_ref[...] = h_new.astype(h_out_ref.dtype)


# ----------------------------- host-side prep -------------------------------
def _band_selector(W):
    # sel[kx, w_in, w_out] = 1 iff w_in == w_out + kx - 1 (horizontal tap map)
    return jnp.asarray(np.stack([np.eye(W, k=1 - kx, dtype=np.float32)
                                 for kx in range(K)]))


def _padded_cin(W, Cin, lane=128):
    # Smallest Cin_pad >= Cin such that W*Cin_pad is a multiple of 128.
    wc = W * Cin
    target = ((wc + lane - 1) // lane) * lane
    while target % W:
        target += lane
    return target // W


def _conv_nhwc(x, w_oihw, b):
    w_hwio = jnp.transpose(w_oihw, (2, 3, 1, 0))
    y = jax.lax.conv_general_dilated(
        x, w_hwio, window_strides=(1, 1), padding=((1, 1), (1, 1)),
        dimension_numbers=("NHWC", "HWIO", "NHWC"))
    return y + b


def prepare_conv_lstm_params(params, H, W, mxu_dtype=jnp.bfloat16):
    """Run ONCE per parameter set: band the conv weights and fold the biases."""
    Cin, Cout = params["w_transform"].shape[:2]
    Cin_pad = _padded_cin(W, Cin)
    sel = _band_selector(W)

    # Transform conv (Cout -> Cin), PyTorch layout (Cin, Cout, K, K):
    # rows = (ky, w_in, c_hidden), cols = (w_out, c_in_padded).
    w_tr = params["w_transform"]
    if Cin_pad != Cin:
        w_tr = jnp.pad(w_tr, ((0, Cin_pad - Cin), (0, 0), (0, 0), (0, 0)))
    wt = jnp.einsum('kuv,oiyk->yuivo', sel, w_tr
                    ).reshape(K * W * Cout, W * Cin_pad)

    # Gate convs (Cin -> Cout) fused over the 4 gates:
    # rows = (ky, w_in, c_in_padded), cols = (gate, w_out, c_out).
    Kg = jnp.stack([params["w_forget"], params["w_input"],
                    params["w_output"], params["w_state"]])  # (4,Cout,Cin,K,K)
    if Cin_pad != Cin:
        Kg = jnp.pad(Kg, ((0, 0), (0, 0), (0, Cin_pad - Cin), (0, 0), (0, 0)))
    wg = jnp.einsum('kuv,goiyk->yuigvo', sel, Kg
                    ).reshape(K * W * Cin_pad, 4 * W * Cout)

    # Fold b_transform and the per-gate biases into one boundary-aware per-row
    # bias map: gates = conv_g(x + conv_t(h)) + [conv_g(b_transform field) + b_g].
    bt_field = jnp.broadcast_to(params["b_transform"], (1, H, W, Cin))
    maps = []
    for wn, bn in (("w_forget", "b_forget"), ("w_input", "b_input"),
                   ("w_output", "b_output"), ("w_state", "b_state")):
        maps.append(_conv_nhwc(bt_field, params[wn], params[bn]
                               ).reshape(H, W * Cout))
    gate_bias = jnp.concatenate(maps, axis=1)                 # (H, 4*W*Cout)

    return dict(wt=wt.astype(mxu_dtype), wg=wg.astype(mxu_dtype),
                gate_bias=gate_bias.astype(jnp.float32),
                H=H, W=W, Cin=Cin, Cin_pad=Cin_pad, Cout=Cout)


# --------------------------------- wrapper -----------------------------------
def conv2d_lstm_cell(x, hidden, cell, prepared, *, batch_tile=None):
    """x: (N,H,W,Cin); hidden/cell: (N,H,W,Cout). Returns (hidden', cell')."""
    N, H, W, Cin = x.shape
    Cout = hidden.shape[-1]
    assert (H, W, Cin, Cout) == (prepared["H"], prepared["W"],
                                 prepared["Cin"], prepared["Cout"])
    Cin_pad = prepared["Cin_pad"]

    if batch_tile is None:
        # M = batch_tile*H ~ 128 when possible, while keeping >= 2 grid steps
        # so both v7x TensorCores get work on the "parallel" axis.
        batch_tile = max(1, min(N // 2 if N > 1 else 1, -(-128 // H)))
        while N % batch_tile:
            batch_tile -= 1
    BT = batch_tile
    assert N % BT == 0

    if Cin_pad != Cin:
        x = jnp.pad(x, ((0, 0), (0, 0), (0, 0), (0, Cin_pad - Cin)))

    R_total, RB = N * H, BT * H
    assert RB % 8 == 0 or RB == R_total, "block rows must be 8-aligned"

    x2 = x.reshape(R_total, W * Cin_pad)
    h2 = hidden.reshape(R_total, W * Cout)
    c2 = cell.reshape(R_total, W * Cout)
    wt, wg = prepared["wt"], prepared["wg"]
    gb = jnp.tile(prepared["gate_bias"], (BT, 1))             # (RB, 4*W*Cout)

    kernel = functools.partial(conv_lstm_cell_kernel, img_h=H)

    grid_spec = pltpu.PrefetchScalarGridSpec(
        num_scalar_prefetch=0,
        grid=(N // BT,),
        in_specs=[
            pl.BlockSpec((RB, W * Cin_pad), lambda n: (n, 0)),
            pl.BlockSpec((RB, W * Cout), lambda n: (n, 0)),
            pl.BlockSpec((RB, W * Cout), lambda n: (n, 0)),
            pl.BlockSpec(wt.shape, lambda n: (0, 0)),
            pl.BlockSpec(wg.shape, lambda n: (0, 0)),
            pl.BlockSpec(gb.shape, lambda n: (0, 0)),
        ],
        out_specs=[
            pl.BlockSpec((RB, W * Cout), lambda n: (n, 0)),
            pl.BlockSpec((RB, W * Cout), lambda n: (n, 0)),
        ],
    )

    h_new, c_new = pl.pallas_call(
        kernel,
        out_shape=(jax.ShapeDtypeStruct((R_total, W * Cout), jnp.float32),
                   jax.ShapeDtypeStruct((R_total, W * Cout), jnp.float32)),
        grid_spec=grid_spec,
        compiler_params=pltpu.CompilerParams(
            dimension_semantics=("parallel",)),   # batch rows -> v7x megacore
    )(x2, h2, c2, wt, wg, gb)

    return (h_new.reshape(N, H, W, Cout), c_new.reshape(N, H, W, Cout))


# ---------------------------- pure-JAX reference ----------------------------
def reference_forward(x, hidden, cell, p):
    t = x + _conv_nhwc(hidden, p["w_transform"], p["b_transform"])
    f = jax.nn.sigmoid(_conv_nhwc(t, p["w_forget"], p["b_forget"]))
    i = jax.nn.sigmoid(_conv_nhwc(t, p["w_input"], p["b_input"]))
    o = jax.nn.sigmoid(_conv_nhwc(t, p["w_output"], p["b_output"]))
    s = jnp.tanh(_conv_nhwc(t, p["w_state"], p["b_state"]))
    c_new = f * cell + i * s
    h_new = o * jnp.tanh(c_new)
    return h_new, c_new


if __name__ == "__main__":
    N, Cin, Cout, Hdim, Wdim = 16, 4, 8, 16, 16
    key = jax.random.PRNGKey(0)
    ks = jax.random.split(key, 16)

    def init(k, shape, fan_in):
        return (jax.random.normal(k, shape, jnp.float32) /
                np.sqrt(float(fan_in))).astype(jnp.float32)

    gate_fan = Cin * K * K
    params = {
        "w_forget":    init(ks[0], (Cout, Cin, K, K), gate_fan),
        "b_forget":    init(ks[1], (Cout,), gate_fan),
        "w_input":     init(ks[2], (Cout, Cin, K, K), gate_fan),
        "b_input":     init(ks[3], (Cout,), gate_fan),
        "w_output":    init(ks[4], (Cout, Cin, K, K), gate_fan),
        "b_output":    init(ks[5], (Cout,), gate_fan),
        "w_state":     init(ks[6], (Cout, Cin, K, K), gate_fan),
        "b_state":     init(ks[7], (Cout,), gate_fan),
        "w_transform": init(ks[8], (Cin, Cout, K, K), Cout * K * K),
        "b_transform": init(ks[9], (Cin,), Cout * K * K),
    }

    x = jax.random.normal(ks[10], (N, Hdim, Wdim, Cin), jnp.float32)
    hidden = jax.random.normal(ks[11], (N, Hdim, Wdim, Cout), jnp.float32)
    cell = jax.random.normal(ks[12], (N, Hdim, Wdim, Cout), jnp.float32)

    # Banding / bias folding runs once per parameter set, outside the hot path.
    prepared = prepare_conv_lstm_params(params, Hdim, Wdim)

    # batch_tile=8 -> M = 128 rows per matmul, 2 "parallel" grid steps.
    h_new, c_new = jax.block_until_ready(
        conv2d_lstm_cell(x, hidden, cell, prepared, batch_tile=8))

    h_ref, c_ref = reference_forward(x, hidden, cell, params)
    # bf16 MXU operands (f32 accumulation) -> relaxed tolerance vs f32 reference.
    np.testing.assert_allclose(np.asarray(h_new), np.asarray(h_ref),
                               atol=5e-2, rtol=5e-2)
    np.testing.assert_allclose(np.asarray(c_new), np.asarray(c_ref),
                               atol=5e-2, rtol=5e-2)

    print("KERNEL_OK")
</pallas_src>

<mosaic_0001>
module attributes {stable_mosaic.version = 11 : i64} {
  func.func @conv_lstm_cell_kernel(%arg0: i32, %arg1: memref<128x128xf32, #tpu.memory_space<vmem>>, %arg2: memref<128x128xf32, #tpu.memory_space<vmem>>, %arg3: memref<128x128xf32, #tpu.memory_space<vmem>>, %arg4: memref<384x128xbf16, #tpu.memory_space<vmem>>, %arg5: memref<384x512xbf16, #tpu.memory_space<vmem>>, %arg6: memref<128x512xf32, #tpu.memory_space<vmem>>, %arg7: memref<128x128xf32, #tpu.memory_space<vmem>>, %arg8: memref<128x128xf32, #tpu.memory_space<vmem>>) attributes {dimension_semantics = [#tpu.dimension_semantics<parallel>], iteration_bounds = array<i64: 2>, scalar_prefetch = 0 : i64, scratch_operands = 0 : i64, tpu.core_type = #tpu.core_type<tc>, window_params = [{transform_indices = @transform_0, window_bounds = array<i64: 128, 128>}, {transform_indices = @transform_1, window_bounds = array<i64: 128, 128>}, {transform_indices = @transform_2, window_bounds = array<i64: 128, 128>}, {pipeline_mode = #tpu.pipeline_mode<synchronous>, transform_indices = @transform_3, window_bounds = array<i64: 384, 128>}, {pipeline_mode = #tpu.pipeline_mode<synchronous>, transform_indices = @transform_4, window_bounds = array<i64: 384, 512>}, {pipeline_mode = #tpu.pipeline_mode<synchronous>, transform_indices = @transform_5, window_bounds = array<i64: 128, 512>}, {transform_indices = @transform_6, window_bounds = array<i64: 128, 128>}, {transform_indices = @transform_7, window_bounds = array<i64: 128, 128>}]} {
    %0 = tpu.iota {dimensions = array<i32: 0>} : vector<128x1xi32>
    %c16_i32 = arith.constant 16 : i32
    %c0_i32 = arith.constant 0 : i32
    %1 = arith.cmpi eq, %c16_i32, %c0_i32 : i32
    %c1_i32 = arith.constant 1 : i32
    %2 = arith.select %1, %c1_i32, %c16_i32 : i32
    %3 = vector.broadcast %2 : i32 to vector<128x1xi32>
    %4 = arith.remsi %0, %3 : vector<128x1xi32>
    %c0_i32_0 = arith.constant 0 : i32
    %5 = vector.broadcast %c0_i32_0 : i32 to vector<128x1xi32>
    %6 = arith.cmpi ne, %4, %5 : vector<128x1xi32>
    %c0_i32_1 = arith.constant 0 : i32
    %7 = vector.broadcast %c0_i32_1 : i32 to vector<128x1xi32>
    %8 = arith.cmpi slt, %4, %7 : vector<128x1xi32>
    %c0_i32_2 = arith.constant 0 : i32
    %9 = arith.cmpi slt, %2, %c0_i32_2 : i32
    %10 = vector.broadcast %9 : i1 to vector<128x1xi1>
    %11 = vector.broadcast %10 : vector<128x1xi1> to vector<128x1xi1>
    %12 = arith.xori %8, %11 : vector<128x1xi1>
    %13 = arith.andi %12, %6 : vector<128x1xi1>
    %14 = vector.broadcast %2 : i32 to vector<128x1xi32>
    %15 = arith.addi %4, %14 : vector<128x1xi32>
    %16 = arith.select %13, %15, %4 : vector<128x1xi1>, vector<128x1xi32>
    %c0_i32_3 = arith.constant 0 : i32
    %17 = vector.broadcast %c0_i32_3 : i32 to vector<128x1xi32>
    %18 = arith.cmpi eq, %16, %17 : vector<128x1xi32>
    %c15_i32 = arith.constant 15 : i32
    %19 = vector.broadcast %c15_i32 : i32 to vector<128x1xi32>
    %20 = arith.cmpi eq, %16, %19 : vector<128x1xi32>
    %c0 = arith.constant 0 : index
    %c0_4 = arith.constant 0 : index
    %21 = vector.load %arg1[%c0, %c0_4] : memref<128x128xf32, #tpu.memory_space<vmem>>, vector<128x128xf32>
    %c0_5 = arith.constant 0 : index
    %c0_6 = arith.constant 0 : index
    %22 = vector.load %arg2[%c0_5, %c0_6] : memref<128x128xf32, #tpu.memory_space<vmem>>, vector<128x128xf32>
    %c0_7 = arith.constant 0 : index
    %c0_8 = arith.constant 0 : index
    %23 = vector.load %arg3[%c0_7, %c0_8] : memref<128x128xf32, #tpu.memory_space<vmem>>, vector<128x128xf32>
    %c1_i32_9 = arith.constant 1 : i32
    %24 = tpu.dynamic_rotate %22 by %c1_i32_9 dim 0 : vector<128x128xf32>, i32 -> vector<128x128xf32>
    %cst = arith.constant 0.000000e+00 : f32
    %25 = vector.shape_cast %18 : vector<128x1xi1> to vector<128x1xi1>
    %26 = vector.broadcast %25 : vector<128x1xi1> to vector<128x128xi1>
    %27 = vector.broadcast %cst : f32 to vector<128x128xf32>
    %28 = arith.select %26, %27, %24 : vector<128x128xi1>, vector<128x128xf32>
    %c127_i32 = arith.constant 127 : i32
    %29 = tpu.dynamic_rotate %22 by %c127_i32 dim 0 : vector<128x128xf32>, i32 -> vector<128x128xf32>
    %cst_10 = arith.constant 0.000000e+00 : f32
    %30 = vector.shape_cast %20 : vector<128x1xi1> to vector<128x1xi1>
    %31 = vector.broadcast %30 : vector<128x1xi1> to vector<128x128xi1>
    %32 = vector.broadcast %cst_10 : f32 to vector<128x128xf32>
    %33 = arith.select %31, %32, %29 : vector<128x128xi1>, vector<128x128xf32>
    %34 = tpu.concatenate %28, %22, %33 in 1 : vector<128x128xf32>, vector<128x128xf32>, vector<128x128xf32> -> vector<128x384xf32>
    %35 = arith.truncf %34 : vector<128x384xf32> to vector<128x384xbf16>
    %c0_11 = arith.constant 0 : index
    %c0_12 = arith.constant 0 : index
    %36 = vector.load %arg4[%c0_11, %c0_12] : memref<384x128xbf16, #tpu.memory_space<vmem>>, vector<384x128xbf16>
    %cst_13 = arith.constant dense<0.000000e+00> : vector<128x128xf32>
    %37 = tpu.matmul %35, %36, %cst_13 {dimension_numbers = #tpu.dot_dimension_numbers<[1], [0], [0], [1], [0, 0, 1, 1], [], []>} : vector<128x384xbf16>, vector<384x128xbf16>, vector<128x128xf32> -> vector<128x128xf32>
    %38 = arith.addf %21, %37 : vector<128x128xf32>
    %c1_i32_14 = arith.constant 1 : i32
    %39 = tpu.dynamic_rotate %38 by %c1_i32_14 dim 0 : vector<128x128xf32>, i32 -> vector<128x128xf32>
    %cst_15 = arith.constant 0.000000e+00 : f32
    %40 = vector.shape_cast %18 : vector<128x1xi1> to vector<128x1xi1>
    %41 = vector.broadcast %40 : vector<128x1xi1> to vector<128x128xi1>
    %42 = vector.broadcast %cst_15 : f32 to vector<128x128xf32>
    %43 = arith.select %41, %42, %39 : vector<128x128xi1>, vector<128x128xf32>
    %c127_i32_16 = arith.constant 127 : i32
    %44 = tpu.dynamic_rotate %38 by %c127_i32_16 dim 0 : vector<128x128xf32>, i32 -> vector<128x128xf32>
    %cst_17 = arith.constant 0.000000e+00 : f32
    %45 = vector.shape_cast %20 : vector<128x1xi1> to vector<128x1xi1>
    %46 = vector.broadcast %45 : vector<128x1xi1> to vector<128x128xi1>
    %47 = vector.broadcast %cst_17 : f32 to vector<128x128xf32>
    %48 = arith.select %46, %47, %44 : vector<128x128xi1>, vector<128x128xf32>
    %49 = tpu.concatenate %43, %38, %48 in 1 : vector<128x128xf32>, vector<128x128xf32>, vector<128x128xf32> -> vector<128x384xf32>
    %50 = arith.truncf %49 : vector<128x384xf32> to vector<128x384xbf16>
    %c0_18 = arith.constant 0 : index
    %c0_19 = arith.constant 0 : index
    %51 = vector.load %arg5[%c0_18, %c0_19] : memref<384x512xbf16, #tpu.memory_space<vmem>>, vector<384x512xbf16>
    %cst_20 = arith.constant dense<0.000000e+00> : vector<128x512xf32>
    %52 = tpu.matmul %50, %51, %cst_20 {dimension_numbers = #tpu.dot_dimension_numbers<[1], [0], [0], [1], [0, 0, 1, 1], [], []>} : vector<128x384xbf16>, vector<384x512xbf16>, vector<128x512xf32> -> vector<128x512xf32>
    %c0_21 = arith.constant 0 : index
    %c0_22 = arith.constant 0 : index
    %53 = vector.load %arg6[%c0_21, %c0_22] : memref<128x512xf32, #tpu.memory_space<vmem>>, vector<128x512xf32>
    %54 = arith.addf %52, %53 : vector<128x512xf32>
    %55 = vector.extract_strided_slice %54 {offsets = [0, 0], sizes = [128, 128], strides = [1, 1]} : vector<128x512xf32> to vector<128x128xf32>
    %56 = arith.negf %55 : vector<128x128xf32>
    %57 = math.exp %56 : vector<128x128xf32>
    %cst_23 = arith.constant 1.000000e+00 : f32
    %58 = vector.broadcast %cst_23 : f32 to vector<128x128xf32>
    %59 = arith.addf %58, %57 : vector<128x128xf32>
    %60 = arith.divf %58, %59 : vector<128x128xf32>
    %61 = vector.extract_strided_slice %54 {offsets = [0, 128], sizes = [128, 128], strides = [1, 1]} : vector<128x512xf32> to vector<128x128xf32>
    %62 = arith.negf %61 : vector<128x128xf32>
    %63 = math.exp %62 : vector<128x128xf32>
    %cst_24 = arith.constant 1.000000e+00 : f32
    %64 = vector.broadcast %cst_24 : f32 to vector<128x128xf32>
    %65 = arith.addf %64, %63 : vector<128x128xf32>
    %66 = arith.divf %64, %65 : vector<128x128xf32>
    %67 = vector.extract_strided_slice %54 {offsets = [0, 256], sizes = [128, 128], strides = [1, 1]} : vector<128x512xf32> to vector<128x128xf32>
    %68 = arith.negf %67 : vector<128x128xf32>
    %69 = math.exp %68 : vector<128x128xf32>
    %cst_25 = arith.constant 1.000000e+00 : f32
    %70 = vector.broadcast %cst_25 : f32 to vector<128x128xf32>
    %71 = arith.addf %70, %69 : vector<128x128xf32>
    %72 = arith.divf %70, %71 : vector<128x128xf32>
    %73 = vector.extract_strided_slice %54 {offsets = [0, 384], sizes = [128, 128], strides = [1, 1]} : vector<128x512xf32> to vector<128x128xf32>
    %74 = math.tanh %73 : vector<128x128xf32>
    %75 = arith.mulf %60, %23 : vector<128x128xf32>
    %76 = arith.mulf %66, %74 : vector<128x128xf32>
    %77 = arith.addf %75, %76 : vector<128x128xf32>
    %78 = math.tanh %77 : vector<128x128xf32>
    %79 = arith.mulf %72, %78 : vector<128x128xf32>
    %c0_26 = arith.constant 0 : index
    %c0_27 = arith.constant 0 : index
    %80 = vector.load %arg8[%c0_26, %c0_27] : memref<128x128xf32, #tpu.memory_space<vmem>>, vector<128x128xf32>
    tpu.vector_store %arg8[%c0_26, %c0_27], %77 {strides = array<i32>} : memref<128x128xf32, #tpu.memory_space<vmem>>, vector<128x128xf32>,
    %c0_28 = arith.constant 0 : index
    %c0_29 = arith.constant 0 : index
    %81 = vector.load %arg7[%c0_28, %c0_29] : memref<128x128xf32, #tpu.memory_space<vmem>>, vector<128x128xf32>
    tpu.vector_store %arg7[%c0_28, %c0_29], %79 {strides = array<i32>} : memref<128x128xf32, #tpu.memory_space<vmem>>, vector<128x128xf32>,
    return
  }
  func.func @transform_0(%arg0: i32) -> (i32, i32) {
    %c0_i32 = arith.constant 0 : i32
    %c0_i32_0 = arith.constant 0 : i32
    return %arg0, %c0_i32 : i32, i32
  }
  func.func @transform_1(%arg0: i32) -> (i32, i32) {
    %c0_i32 = arith.constant 0 : i32
    %c0_i32_0 = arith.constant 0 : i32
    return %arg0, %c0_i32 : i32, i32
  }
  func.func @transform_2(%arg0: i32) -> (i32, i32) {
    %c0_i32 = arith.constant 0 : i32
    %c0_i32_0 = arith.constant 0 : i32
    return %arg0, %c0_i32 : i32, i32
  }
  func.func @transform_3(%arg0: i32) -> (i32, i32) {
    %c0_i32 = arith.constant 0 : i32
    %c0_i32_0 = arith.constant 0 : i32
    %c0_i32_1 = arith.constant 0 : i32
    return %c0_i32, %c0_i32_0 : i32, i32
  }
  func.func @transform_4(%arg0: i32) -> (i32, i32) {
    %c0_i32 = arith.constant 0 : i32
    %c0_i32_0 = arith.constant 0 : i32
    %c0_i32_1 = arith.constant 0 : i32
    return %c0_i32, %c0_i32_0 : i32, i32
  }
  func.func @transform_5(%arg0: i32) -> (i32, i32) {
    %c0_i32 = arith.constant 0 : i32
    %c0_i32_0 = arith.constant 0 : i32
    %c0_i32_1 = arith.constant 0 : i32
    return %c0_i32, %c0_i32_0 : i32, i32
  }
  func.func @transform_6(%arg0: i32) -> (i32, i32) {
    %c0_i32 = arith.constant 0 : i32
    %c0_i32_0 = arith.constant 0 : i32
    return %arg0, %c0_i32 : i32, i32
  }
  func.func @transform_7(%arg0: i32) -> (i32, i32) {
    %c0_i32 = arith.constant 0 : i32
    %c0_i32_0 = arith.constant 0 : i32
    return %arg0, %c0_i32 : i32, i32
  }
}

</mosaic_0001>

<llo_original>
// kernel: tpu_custom_call.1
$region0: #{tpu_custom_call.1}
  #allocation0 [shape = 'u32[]', space=smem, size = 0x4, offset = 0x4, fixed_abs, tag = 'smem constant byte address 0x4 - core index']
  #allocation1 [shape = 'u32[144,128]{1,0:T(1,128)}', space=vmem, size = 0x12000, scoped, tag = 'internal scratch']
  %s0 = inlined_call_operand.hbm [shape: f32[256,128], index: 0, kind: input, shape index: {}]
  %s1 = inlined_call_operand.hbm [shape: f32[256,128], index: 1, kind: input, shape index: {}]
  %s2 = inlined_call_operand.hbm [shape: f32[256,128], index: 2, kind: input, shape index: {}]
  %s3 = inlined_call_operand.hbm [shape: bf16[384,128], index: 3, kind: input, shape index: {}]
  %s4 = inlined_call_operand.hbm [shape: bf16[384,512], index: 4, kind: input, shape index: {}]
  %s5 = inlined_call_operand.hbm [shape: f32[128,512], index: 5, kind: input, shape index: {}]
  %s6 = inlined_call_operand.hbm [shape: f32[256,128], index: 6, kind: output, shape index: {0}]
  %s7 = inlined_call_operand.hbm [shape: f32[256,128], index: 7, kind: output, shape index: {1}]
  %8 = xla_tuple %s6, %s7
  %s9 = sld [smem:[#allocation0]]
  $region89: #{tpu_custom_call.1} parent=0
    _
  %s11 = ssub.s32 1, %s9
  %s12 = scalar_select 0, %s11, %s9
  $region1: #{tpu_custom_call.1} parent=0
    #allocation2 [shape = 'u8[131072]{0}', space=vmem, size = 0x20000, scoped, tag = 'input window, operand 0']
    #allocation3 [shape = 's32[2]{0}', space=sflag, size = 0x8, scoped, tag = 'scoped memory for tpu_custom_call.1']
    #allocation4 [shape = 's32[2]{0}', space=sflag, size = 0x8, scoped, tag = 'scoped memory for tpu_custom_call.1']
    #allocation5 [shape = 'u8[131072]{0}', space=vmem, size = 0x20000, scoped, tag = 'input window, operand 1']
    #allocation6 [shape = 's32[2]{0}', space=sflag, size = 0x8, scoped, tag = 'scoped memory for tpu_custom_call.1']
    #allocation7 [shape = 'u8[131072]{0}', space=vmem, size = 0x20000, scoped, tag = 'input window, operand 2']
    #allocation8 [shape = 'u8[98304]{0}', space=vmem, size = 0x18000, scoped, tag = 'input window, operand 3, single buffered']
    #allocation9 [shape = 's32[1]{0}', space=sflag, size = 0x4, scoped, tag = 'scoped memory for tpu_custom_call.1']
    #allocation10 [shape = 'u8[393216]{0}', space=vmem, size = 0x60000, scoped, tag = 'input window, operand 4, single buffered']
    #allocation11 [shape = 'u8[262144]{0}', space=vmem, size = 0x40000, scoped, tag = 'input window, operand 5, single buffered']
    #allocation12 [shape = 's32[1]{0}', space=sflag, size = 0x4, scoped, tag = 'scoped memory for tpu_custom_call.1']
    #allocation13 [shape = 'u8[131072]{0}', space=vmem, size = 0x20000, scoped, tag = 'output window, operand 0']
    #allocation14 [shape = 'u8[131072]{0}', space=vmem, size = 0x20000, scoped, tag = 'output window, operand 1']
    #allocation15 [shape = 's32[2]{0}', space=sflag, size = 0x8, scoped, tag = 'scoped memory for tpu_custom_call.1']
    %13 = vsyncpa [#allocation3], 0
    %s14 = scalar_lea.sflag [#allocation3], 1
    %15 = vsyncpa %s14, 0
    %16 = vsyncpa [#allocation6], 0
    %s17 = scalar_lea.sflag [#allocation6], 1
    %18 = vsyncpa %s17, 0
    %19 = vsyncpa [#allocation9], 0
    %20 = vsyncpa [#allocation12], 0
    %21 = vsyncpa [#allocation4], 0
    %s22 = scalar_lea.sflag [#allocation4], 1
    %23 = vsyncpa %s22, 0
    %24 = vsyncpa [#allocation15], 0
    %s25 = scalar_lea.sflag [#allocation15], 1
    %26 = vsyncpa %s25, 0
    loop: start=0, step=1, limit=4
    $region2: #{tpu_custom_call.1} parent=1 // loop_pre_header
      _
    $region3: #{tpu_custom_call.1} parent=1 // loop_header
      %s28 = sphi 0, %s32
      %p29 = scmp.ge.s32.totalorder %s28, 4
      %s38 = sphi 0, %s40
      %s41 = sphi 0, %s38
      %s42 = sphi 0, %s41
      %s58 = sphi 0, %s42
      %s64 = sphi 0, %s66
      %s67 = sphi 0, %s64
      %s68 = sphi 0, %s67
      %s84 = sphi 0, %s68
      %s90 = sphi 0, %s92
      %s93 = sphi 0, %s90
      %s94 = sphi 0, %s93
      %s110 = sphi 0, %s94
      %s114 = sphi 0, %s114
      %s116 = sphi 0, %s114
      %s117 = sphi 0, %s116
      %s131 = sphi 0, %s117
      %s135 = sphi 0, %s135
      %s137 = sphi 0, %s135
      %s138 = sphi 0, %s137
      %s152 = sphi 0, %s138
      %s156 = sphi 0, %s156
      %s158 = sphi 0, %s156
      %s159 = sphi 0, %s158
      %s173 = sphi 0, %s159
      %s179 = sphi 0, %s181
      %s182 = sphi 0, %s179
      %s183 = sphi 0, %s182
      %s199 = sphi 0, %s183
      %s205 = sphi 0, %s207
      %s208 = sphi 0, %s205
      %s209 = sphi 0, %s208
      %s225 = sphi 0, %s209
    $region4: #{tpu_custom_call.1} parent=1 // loop_header_branch
      %31 = sbr.rel (%p29) target = $region8
    $region5: #{tpu_custom_call.1} parent=1 // loop_body
      %s33 = ssub.s32 %s28, 1
      %s34 = ssub.s32 %s28, 2
      %s35 = sadd.s32 %s28, 1
      %s36 = ssub.s32 %s28, %s35
      %p37 = scmp.eq.s32.totalorder %s36, 0
      %s39 = sadd.s32 %s38, 1
      %s40 = scalar_select %p37, %s38, %s39
      %p43 = pneg %p37
      %p44 = scmp.eq.s32.totalorder %s28, 1
      %p45 = por %p43, %p44
      %p46 = scmp.ne.s32.totalorder %s38, %s41
      %p47 = scmp.eq.s32.totalorder %s28, 0
      %p48 = por %p46, %p47
      %p49 = scmp.ne.s32.totalorder %s38, %s41
      %p50 = scmp.eq.s32.totalorder %s33, 1
      %p51 = por %p49, %p50
      %p52 = scmp.ne.s32.totalorder %s41, %s42
      %p53 = scmp.eq.s32.totalorder %s33, 0
      %p54 = por %p52, %p53
      %p55 = scmp.ne.s32.totalorder %s41, %s42
      %p56 = scmp.eq.s32.totalorder %s34, 1
      %p57 = por %p55, %p56
      %p59 = scmp.ne.s32.totalorder %s42, %s58
      %p60 = scmp.eq.s32.totalorder %s34, 0
      %p61 = por %p59, %p60
      %s62 = ssub.s32 %s28, %s35
      %p63 = scmp.eq.s32.totalorder %s62, 0
      %s65 = sadd.s32 %s64, 1
      %s66 = scalar_select %p63, %s64, %s65
      %p69 = pneg %p63
      %p70 = scmp.eq.s32.totalorder %s28, 1
      %p71 = por %p69, %p70
      %p72 = scmp.ne.s32.totalorder %s64, %s67
      %p73 = scmp.eq.s32.totalorder %s28, 0
      %p74 = por %p72, %p73
      %p75 = scmp.ne.s32.totalorder %s64, %s67
      %p76 = scmp.eq.s32.totalorder %s33, 1
      %p77 = por %p75, %p76
      %p78 = scmp.ne.s32.totalorder %s67, %s68
      %p79 = scmp.eq.s32.totalorder %s33, 0
      %p80 = por %p78, %p79
      %p81 = scmp.ne.s32.totalorder %s67, %s68
      %p82 = scmp.eq.s32.totalorder %s34, 1
      %p83 = por %p81, %p82
      %p85 = scmp.ne.s32.totalorder %s68, %s84
      %p86 = scmp.eq.s32.totalorder %s34, 0
      %p87 = por %p85, %p86
      %s88 = ssub.s32 %s28, %s35
      %p89 = scmp.eq.s32.totalorder %s88, 0
      %s91 = sadd.s32 %s90, 1
      %s92 = scalar_select %p89, %s90, %s91
      %p95 = pneg %p89
      %p96 = scmp.eq.s32.totalorder %s28, 1
      %p97 = por %p95, %p96
      %p98 = scmp.ne.s32.totalorder %s90, %s93
      %p99 = scmp.eq.s32.totalorder %s28, 0
      %p100 = por %p98, %p99
      %p101 = scmp.ne.s32.totalorder %s90, %s93
      %p102 = scmp.eq.s32.totalorder %s33, 1
      %p103 = por %p101, %p102
      %p104 = scmp.ne.s32.totalorder %s93, %s94
      %p105 = scmp.eq.s32.totalorder %s33, 0
      %p106 = por %p104, %p105
      %p107 = scmp.ne.s32.totalorder %s93, %s94
      %p108 = scmp.eq.s32.totalorder %s34, 1
      %p109 = por %p107, %p108
      %p111 = scmp.ne.s32.totalorder %s94, %s110
      %p112 = scmp.eq.s32.totalorder %s34, 0
      %p113 = por %p111, %p112
      %s115 = sadd.s32 %s114, 1
      %p118 = scmp.eq.s32.totalorder %s28, 1
      %p119 = scmp.ne.s32.totalorder %s114, %s116
      %p120 = scmp.eq.s32.totalorder %s28, 0
      %p121 = por %p119, %p120
      %p122 = scmp.ne.s32.totalorder %s114, %s116
      %p123 = scmp.eq.s32.totalorder %s33, 1
      %p124 = por %p122, %p123
      %p125 = scmp.ne.s32.totalorder %s116, %s117
      %p126 = scmp.eq.s32.totalorder %s33, 0
      %p127 = por %p125, %p126
      %p128 = scmp.ne.s32.totalorder %s116, %s117
      %p129 = scmp.eq.s32.totalorder %s34, 1
      %p130 = por %p128, %p129
      %p132 = scmp.ne.s32.totalorder %s117, %s131
      %p133 = scmp.eq.s32.totalorder %s34, 0
      %p134 = por %p132, %p133
      %s136 = sadd.s32 %s135, 1
      %p139 = scmp.eq.s32.totalorder %s28, 1
      %p140 = scmp.ne.s32.totalorder %s135, %s137
      %p141 = scmp.eq.s32.totalorder %s28, 0
      %p142 = por %p140, %p141
      %p143 = scmp.ne.s32.totalorder %s135, %s137
      %p144 = scmp.eq.s32.totalorder %s33, 1
      %p145 = por %p143, %p144
      %p146 = scmp.ne.s32.totalorder %s137, %s138
      %p147 = scmp.eq.s32.totalorder %s33, 0
      %p148 = por %p146, %p147
      %p149 = scmp.ne.s32.totalorder %s137, %s138
      %p150 = scmp.eq.s32.totalorder %s34, 1
      %p151 = por %p149, %p150
      %p153 = scmp.ne.s32.totalorder %s138, %s152
      %p154 = scmp.eq.s32.totalorder %s34, 0
      %p155 = por %p153, %p154
      %s157 = sadd.s32 %s156, 1
      %p160 = scmp.eq.s32.totalorder %s28, 1
      %p161 = scmp.ne.s32.totalorder %s156, %s158
      %p162 = scmp.eq.s32.totalorder %s28, 0
      %p163 = por %p161, %p162
      %p164 = scmp.ne.s32.totalorder %s156, %s158
      %p165 = scmp.eq.s32.totalorder %s33, 1
      %p166 = por %p164, %p165
      %p167 = scmp.ne.s32.totalorder %s158, %s159
      %p168 = scmp.eq.s32.totalorder %s33, 0
      %p169 = por %p167, %p168
      %p170 = scmp.ne.s32.totalorder %s158, %s159
      %p171 = scmp.eq.s32.totalorder %s34, 1
      %p172 = por %p170, %p171
      %p174 = scmp.ne.s32.totalorder %s159, %s173
      %p175 = scmp.eq.s32.totalorder %s34, 0
      %p176 = por %p174, %p175
      %s177 = ssub.s32 %s28, %s35
      %p178 = scmp.eq.s32.totalorder %s177, 0
      %s180 = sadd.s32 %s179, 1
      %s181 = scalar_select %p178, %s179, %s180
      %p184 = pneg %p178
      %p185 = scmp.eq.s32.totalorder %s28, 1
      %p186 = por %p184, %p185
      %p187 = scmp.ne.s32.totalorder %s179, %s182
      %p188 = scmp.eq.s32.totalorder %s28, 0
      %p189 = por %p187, %p188
      %p190 = scmp.ne.s32.totalorder %s179, %s182
      %p191 = scmp.eq.s32.totalorder %s33, 1
      %p192 = por %p190, %p191
      %p193 = scmp.ne.s32.totalorder %s182, %s183
      %p194 = scmp.eq.s32.totalorder %s33, 0
      %p195 = por %p193, %p194
      %p196 = scmp.ne.s32.totalorder %s182, %s183
      %p197 = scmp.eq.s32.totalorder %s34, 1
      %p198 = por %p196, %p197
      %p200 = scmp.ne.s32.totalorder %s183, %s199
      %p201 = scmp.eq.s32.totalorder %s34, 0
      %p202 = por %p200, %p201
      %s203 = ssub.s32 %s28, %s35
      %p204 = scmp.eq.s32.totalorder %s203, 0
      %s206 = sadd.s32 %s205, 1
      %s207 = scalar_select %p204, %s205, %s206
      %p210 = pneg %p204
      %p211 = scmp.eq.s32.totalorder %s28, 1
      %p212 = por %p210, %p211
      %p213 = scmp.ne.s32.totalorder %s205, %s208
      %p214 = scmp.eq.s32.totalorder %s28, 0
      %p215 = por %p213, %p214
      %p216 = scmp.ne.s32.totalorder %s205, %s208
      %p217 = scmp.eq.s32.totalorder %s33, 1
      %p218 = por %p216, %p217
      %p219 = scmp.ne.s32.totalorder %s208, %s209
      %p220 = scmp.eq.s32.totalorder %s33, 0
      %p221 = por %p219, %p220
      %p222 = scmp.ne.s32.totalorder %s208, %s209
      %p223 = scmp.eq.s32.totalorder %s34, 1
      %p224 = por %p222, %p223
      %p226 = scmp.ne.s32.totalorder %s209, %s225
      %p227 = scmp.eq.s32.totalorder %s34, 0
      %p228 = por %p226, %p227
      %p229 = scmp.le.s32.totalorder 1, %s28
      %p230 = scmp.lt.s32.totalorder %s28, 3
      %p231 = pnand %p229, %p230
      %p232 = pneg %p231
      // Predicated region
      $region9: #{tpu_custom_call.1} parent=5 // pred_check
        _
      $region10: #{tpu_custom_call.1} parent=5 // pred_check_branch
        %234 = sbr.rel (%p231) target = $region12
      $region11: #{tpu_custom_call.1} parent=5 // pred_region
        %s235 = ssub.s32 %s28, 1
        // Predicated region
        $region13: #{tpu_custom_call.1} parent=11 // pred_check
          %p236 = pneg %p127
        $region14: #{tpu_custom_call.1} parent=11 // pred_check_branch
          %238 = sbr.rel (%p236) target = $region16
        $region15: #{tpu_custom_call.1} parent=11 // pred_region
          %s240 = ssub.s32 3072, 3072
          %241 = vsyncadd [#allocation9], %s240
          %s242 = sshll.u32 [#allocation8], 4
          %s243 = int_to_ptr.vmem [resolvable:$true] %s242
          %248 = dma.hbm_to_vmem [thread:$0]  %s3, 3072, %s243, [#allocation9], 64, 64, 4
        $region16: #{tpu_custom_call.1} parent=11 // pred_fallthru
          _
        // Predicated region
        $region17: #{tpu_custom_call.1} parent=11 // pred_check
          %p249 = pneg %p148
        $region18: #{tpu_custom_call.1} parent=11 // pred_check_branch
          %251 = sbr.rel (%p249) target = $region20
        $region19: #{tpu_custom_call.1} parent=11 // pred_region
          %s253 = ssub.s32 12288, 12288
          %254 = vsyncadd [#allocation9], %s253
          %s255 = sshll.u32 [#allocation10], 4
          %s256 = int_to_ptr.vmem [resolvable:$true] %s255
          %261 = dma.hbm_to_vmem [thread:$0]  %s4, 12288, %s256, [#allocation9], 256, 256, 16
        $region20: #{tpu_custom_call.1} parent=11 // pred_fallthru
          _
        // Predicated region
        $region21: #{tpu_custom_call.1} parent=11 // pred_check
          %p262 = pneg %p169
        $region22: #{tpu_custom_call.1} parent=11 // pred_check_branch
          %264 = sbr.rel (%p262) target = $region24
        $region23: #{tpu_custom_call.1} parent=11 // pred_region
          %s266 = ssub.s32 8192, 8192
          %267 = vsyncadd [#allocation12], %s266
          %s268 = sshll.u32 [#allocation11], 4
          %s269 = int_to_ptr.vmem [resolvable:$true] %s268
          %274 = dma.hbm_to_vmem [thread:$0]  %s5, 8192, %s269, [#allocation12], 512, 512, 32
        $region24: #{tpu_custom_call.1} parent=11 // pred_fallthru
          _
      $region12: #{tpu_custom_call.1} parent=5 // pred_fallthru
        _
      %p275 = scmp.lt.s32.totalorder %s28, 2
      // Predicated region
      $region25: #{tpu_custom_call.1} parent=5 // pred_check
        %p276 = pneg %p275
      $region26: #{tpu_custom_call.1} parent=5 // pred_check_branch
        %278 = sbr.rel (%p276) target = $region28
      $region27: #{tpu_custom_call.1} parent=5 // pred_region
        // Predicated region
        $region29: #{tpu_custom_call.1} parent=27 // pred_check
          %p279 = pneg %p48
        $region30: #{tpu_custom_call.1} parent=27 // pred_check_branch
          %281 = sbr.rel (%p279) target = $region32
        $region31: #{tpu_custom_call.1} parent=27 // pred_region
          %s282 = sand.u32 %s38, 1
          %s283 = scalar_lea.sflag [#allocation3], %s282
          %s284 = sand.u32 %s38, 1
          %s285 = smul.addr %s284, 128
          %s286 = scalar_lea.vmem [#allocation2], %s285
          %s287 = smul.u32 16, %s28
          %s289 = ssub.s32 2048, 2048
          %290 = vsyncadd %s283, %s289
          %s291 = smul.addr %s287, 128
          %s292 = scalar_lea.hbm %s0, %s291
          %s293 = sshll.u32 %s286, 4
          %s294 = int_to_ptr.vmem [resolvable:$true] %s293
          %299 = dma.hbm_to_vmem [thread:$0]  %s292, 2048, %s294, %s283, 128, 128, 8
        $region32: #{tpu_custom_call.1} parent=27 // pred_fallthru
          _
        // Predicated region
        $region33: #{tpu_custom_call.1} parent=27 // pred_check
          %p300 = pneg %p74
        $region34: #{tpu_custom_call.1} parent=27 // pred_check_branch
          %302 = sbr.rel (%p300) target = $region36
        $region35: #{tpu_custom_call.1} parent=27 // pred_region
          %s303 = sand.u32 %s28, 1
          %s304 = scalar_lea.sflag [#allocation6], %s303
          %s305 = sand.u32 %s64, 1
          %s306 = smul.addr %s305, 128
          %s307 = scalar_lea.vmem [#allocation5], %s306
          %s308 = smul.u32 16, %s28
          %s310 = ssub.s32 2048, 2048
          %311 = vsyncadd %s304, %s310
          %s312 = smul.addr %s308, 128
          %s313 = scalar_lea.hbm %s1, %s312
          %s314 = sshll.u32 %s307, 4
          %s315 = int_to_ptr.vmem [resolvable:$true] %s314
          %320 = dma.hbm_to_vmem [thread:$0]  %s313, 2048, %s315, %s304, 128, 128, 8
        $region36: #{tpu_custom_call.1} parent=27 // pred_fallthru
          _
        // Predicated region
        $region37: #{tpu_custom_call.1} parent=27 // pred_check
          %p321 = pneg %p100
        $region38: #{tpu_custom_call.1} parent=27 // pred_check_branch
          %323 = sbr.rel (%p321) target = $region40
        $region39: #{tpu_custom_call.1} parent=27 // pred_region
          %s324 = sand.u32 %s28, 1
          %s325 = scalar_lea.sflag [#allocation6], %s324
          %s326 = sand.u32 %s90, 1
          %s327 = smul.addr %s326, 128
          %s328 = scalar_lea.vmem [#allocation7], %s327
          %s329 = smul.u32 16, %s28
          %s331 = ssub.s32 2048, 2048
          %332 = vsyncadd %s325, %s331
          %s333 = smul.addr %s329, 128
          %s334 = scalar_lea.hbm %s2, %s333
          %s335 = sshll.u32 %s328, 4
          %s336 = int_to_ptr.vmem [resolvable:$true] %s335
          %341 = dma.hbm_to_vmem [thread:$0]  %s334, 2048, %s336, %s325, 128, 128, 8
        $region40: #{tpu_custom_call.1} parent=27 // pred_fallthru
          _
      $region28: #{tpu_custom_call.1} parent=5 // pred_fallthru
        _
      %p342 = scmp.le.s32.totalorder 1, %s28
      %p343 = scmp.lt.s32.totalorder %s28, 3
      %p344 = pnand %p342, %p343
      %p345 = pneg %p344
      // Predicated region
      $region41: #{tpu_custom_call.1} parent=5 // pred_check
        _
      $region42: #{tpu_custom_call.1} parent=5 // pred_check_branch
        %347 = sbr.rel (%p344) target = $region44
      $region43: #{tpu_custom_call.1} parent=5 // pred_region
        %s348 = ssub.s32 %s28, 1
        %s349 = sand.u32 %s41, 1
        %s350 = scalar_lea.sflag [#allocation3], %s349
        %s351 = sand.u32 %s41, 1
        %s352 = smul.addr %s351, 128
        %s353 = scalar_lea.vmem [#allocation2], %s352
        // Predicated region
        $region45: #{tpu_custom_call.1} parent=43 // pred_check
          %p354 = pneg %p54
        $region46: #{tpu_custom_call.1} parent=43 // pred_check_branch
          %356 = sbr.rel (%p354) target = $region48
        $region47: #{tpu_custom_call.1} parent=43 // pred_region
          %357 = dma.done %s350, 2048
        $region48: #{tpu_custom_call.1} parent=43 // pred_fallthru
          _
        %s358 = sand.u32 %s33, 1
        %s359 = scalar_lea.sflag [#allocation6], %s358
        %s360 = sand.u32 %s67, 1
        %s361 = smul.addr %s360, 128
        %s362 = scalar_lea.vmem [#allocation5], %s361
        // Predicated region
        $region49: #{tpu_custom_call.1} parent=43 // pred_check
          %p363 = pneg %p80
        $region50: #{tpu_custom_call.1} parent=43 // pred_check_branch
          %365 = sbr.rel (%p363) target = $region52
        $region51: #{tpu_custom_call.1} parent=43 // pred_region
          %366 = dma.done %s359, 2048
        $region52: #{tpu_custom_call.1} parent=43 // pred_fallthru
          _
        %s367 = sand.u32 %s33, 1
        %s368 = scalar_lea.sflag [#allocation6], %s367
        %s369 = sand.u32 %s93, 1
        %s370 = smul.addr %s369, 128
        %s371 = scalar_lea.vmem [#allocation7], %s370
        // Predicated region
        $region53: #{tpu_custom_call.1} parent=43 // pred_check
          %p372 = pneg %p106
        $region54: #{tpu_custom_call.1} parent=43 // pred_check_branch
          %374 = sbr.rel (%p372) target = $region56
        $region55: #{tpu_custom_call.1} parent=43 // pred_region
          %375 = dma.done %s368, 2048
        $region56: #{tpu_custom_call.1} parent=43 // pred_fallthru
          _
        // Predicated region
        $region57: #{tpu_custom_call.1} parent=43 // pred_check
          %p376 = pneg %p127
        $region58: #{tpu_custom_call.1} parent=43 // pred_check_branch
          %378 = sbr.rel (%p376) target = $region60
        $region59: #{tpu_custom_call.1} parent=43 // pred_region
          %379 = dma.done [#allocation9], 3072
        $region60: #{tpu_custom_call.1} parent=43 // pred_fallthru
          _
        // Predicated region
        $region61: #{tpu_custom_call.1} parent=43 // pred_check
          %p380 = pneg %p148
        $region62: #{tpu_custom_call.1} parent=43 // pred_check_branch
          %382 = sbr.rel (%p380) target = $region64
        $region63: #{tpu_custom_call.1} parent=43 // pred_region
          %383 = dma.done [#allocation9], 12288
        $region64: #{tpu_custom_call.1} parent=43 // pred_fallthru
          _
        // Predicated region
        $region65: #{tpu_custom_call.1} parent=43 // pred_check
          %p384 = pneg %p169
        $region66: #{tpu_custom_call.1} parent=43 // pred_check_branch
          %386 = sbr.rel (%p384) target = $region68
        $region67: #{tpu_custom_call.1} parent=43 // pred_region
          %387 = dma.done [#allocation12], 8192
        $region68: #{tpu_custom_call.1} parent=43 // pred_fallthru
          _
        %s388 = sand.u32 %s41, 1
        %s389 = scalar_lea.sflag [#allocation3], %s388
        %s390 = sand.u32 %s41, 1
        %s391 = smul.addr %s390, 128
        %s392 = scalar_lea.vmem [#allocation2], %s391
        %p393 = pneg %p54
        %p394 = pneg %p51
        %s395 = sand.u32 %s33, 1
        %s396 = scalar_lea.sflag [#allocation6], %s395
        %s397 = sand.u32 %s67, 1
        %s398 = smul.addr %s397, 128
        %s399 = scalar_lea.vmem [#allocation5], %s398
        %p400 = pneg %p80
        %p401 = pneg %p77
        %s402 = sand.u32 %s33, 1
        %s403 = scalar_lea.sflag [#allocation6], %s402
        %s404 = sand.u32 %s93, 1
        %s405 = smul.addr %s404, 128
        %s406 = scalar_lea.vmem [#allocation7], %s405
        %p407 = pneg %p106
        %p408 = pneg %p103
        %p409 = pneg %p127
        %p410 = pneg %p124
        %p411 = pneg %p148
        %p412 = pneg %p145
        %p413 = pneg %p169
        %p414 = pneg %p166
        %p415 = pneg %p195
        %p416 = pneg %p192
        %s417 = sand.u32 %s182, 1
        %s418 = scalar_lea.sflag [#allocation4], %s417
        %s419 = sand.u32 %s182, 1
        %s420 = smul.addr %s419, 128
        %s421 = scalar_lea.vmem [#allocation13], %s420
        %p422 = pneg %p221
        %p423 = pneg %p218
        %s424 = sand.u32 %s208, 1
        %s425 = scalar_lea.sflag [#allocation15], %s424
        %s426 = sand.u32 %s208, 1
        %s427 = smul.addr %s426, 128
        %s428 = scalar_lea.vmem [#allocation14], %s427
        %s429 = smul.u32 16, %s33
        %s430 = smul.u32 16, %s33
        %s431 = smul.u32 16, %s33
        %s432 = smul.u32 16, %s33
        %s433 = smul.u32 16, %s33
        %v435 = vlaneseq
        %v436 = vshrl.u32 %v435, 7
        %v437 = vadd.s32 %v436, 8
        %v438 = vadd.s32 %v436, 16
        %v439 = vadd.s32 %v436, 24
        %v440 = vadd.s32 %v436, 32
        %v441 = vadd.s32 %v436, 40
        %v442 = vadd.s32 %v436, 48
        %v443 = vadd.s32 %v436, 56
        %v444 = vadd.s32 %v436, 64
        %v445 = vadd.s32 %v436, 72
        %v446 = vadd.s32 %v436, 80
        %v447 = vadd.s32 %v436, 88
        %v448 = vadd.s32 %v436, 96
        %v449 = vadd.s32 %v436, 104
        %v450 = vadd.s32 %v436, 112
        %v451 = vadd.s32 %v436, 120
        %vm452 = vcmp.lt.s32.totalorder %v436, 0
        %v453 = vsub.s32 0, %v436
        %v454 = vsel %vm452, %v453, %v436
        %v455 = vshrl.u32 %v454, 4
        %v456 = vand.u32 %v454, 15
        %v457 = vsub.s32 0, %v456
        %v458 = vsel %vm452, %v457, %v456
        %vm459 = vcmp.lt.s32.totalorder %v437, 0
        %v460 = vsub.s32 0, %v437
        %v461 = vsel %vm459, %v460, %v437
        %v462 = vshrl.u32 %v461, 4
        %v463 = vand.u32 %v461, 15
        %v464 = vsub.s32 0, %v463
        %v465 = vsel %vm459, %v464, %v463
        %vm466 = vcmp.lt.s32.totalorder %v438, 0
        %v467 = vsub.s32 0, %v438
        %v468 = vsel %vm466, %v467, %v438
        %v469 = vshrl.u32 %v468, 4
        %v470 = vand.u32 %v468, 15
        %v471 = vsub.s32 0, %v470
        %v472 = vsel %vm466, %v471, %v470
        %vm473 = vcmp.lt.s32.totalorder %v439, 0
        %v474 = vsub.s32 0, %v439
        %v475 = vsel %vm473, %v474, %v439
        %v476 = vshrl.u32 %v475, 4
        %v477 = vand.u32 %v475, 15
        %v478 = vsub.s32 0, %v477
        %v479 = vsel %vm473, %v478, %v477
        %vm480 = vcmp.lt.s32.totalorder %v440, 0
        %v481 = vsub.s32 0, %v440
        %v482 = vsel %vm480, %v481, %v440
        %v483 = vshrl.u32 %v482, 4
        %v484 = vand.u32 %v482, 15
        %v485 = vsub.s32 0, %v484
        %v486 = vsel %vm480, %v485, %v484
        %vm487 = vcmp.lt.s32.totalorder %v441, 0
        %v488 = vsub.s32 0, %v441
        %v489 = vsel %vm487, %v488, %v441
        %v490 = vshrl.u32 %v489, 4
        %v491 = vand.u32 %v489, 15
        %v492 = vsub.s32 0, %v491
        %v493 = vsel %vm487, %v492, %v491
        %vm494 = vcmp.lt.s32.totalorder %v442, 0
        %v495 = vsub.s32 0, %v442
        %v496 = vsel %vm494, %v495, %v442
        %v497 = vshrl.u32 %v496, 4
        %v498 = vand.u32 %v496, 15
        %v499 = vsub.s32 0, %v498
        %v500 = vsel %vm494, %v499, %v498
        %vm501 = vcmp.lt.s32.totalorder %v443, 0
        %v502 = vsub.s32 0, %v443
        %v503 = vsel %vm501, %v502, %v443
        %v504 = vshrl.u32 %v503, 4
        %v505 = vand.u32 %v503, 15
        %v506 = vsub.s32 0, %v505
        %v507 = vsel %vm501, %v506, %v505
        %vm508 = vcmp.lt.s32.totalorder %v444, 0
        %v509 = vsub.s32 0, %v444
        %v510 = vsel %vm508, %v509, %v444
        %v511 = vshrl.u32 %v510, 4
        %v512 = vand.u32 %v510, 15
        %v513 = vsub.s32 0, %v512
        %v514 = vsel %vm508, %v513, %v512
        %vm515 = vcmp.lt.s32.totalorder %v445, 0
        %v516 = vsub.s32 0, %v445
        %v517 = vsel %vm515, %v516, %v445
        %v518 = vshrl.u32 %v517, 4
        %v519 = vand.u32 %v517, 15
        %v520 = vsub.s32 0, %v519
        %v521 = vsel %vm515, %v520, %v519
        %vm522 = vcmp.lt.s32.totalorder %v446, 0
        %v523 = vsub.s32 0, %v446
        %v524 = vsel %vm522, %v523, %v446
        %v525 = vshrl.u32 %v524, 4
        %v526 = vand.u32 %v524, 15
        %v527 = vsub.s32 0, %v526
        %v528 = vsel %vm522, %v527, %v526
        %vm529 = vcmp.lt.s32.totalorder %v447, 0
        %v530 = vsub.s32 0, %v447
        %v531 = vsel %vm529, %v530, %v447
        %v532 = vshrl.u32 %v531, 4
        %v533 = vand.u32 %v531, 15
        %v534 = vsub.s32 0, %v533
        %v535 = vsel %vm529, %v534, %v533
        %vm536 = vcmp.lt.s32.totalorder %v448, 0
        %v537 = vsub.s32 0, %v448
        %v538 = vsel %vm536, %v537, %v448
        %v539 = vshrl.u32 %v538, 4
        %v540 = vand.u32 %v538, 15
        %v541 = vsub.s32 0, %v540
        %v542 = vsel %vm536, %v541, %v540
        %vm543 = vcmp.lt.s32.totalorder %v449, 0
        %v544 = vsub.s32 0, %v449
        %v545 = vsel %vm543, %v544, %v449
        %v546 = vshrl.u32 %v545, 4
        %v547 = vand.u32 %v545, 15
        %v548 = vsub.s32 0, %v547
        %v549 = vsel %vm543, %v548, %v547
        %vm550 = vcmp.lt.s32.totalorder %v450, 0
        %v551 = vsub.s32 0, %v450
        %v552 = vsel %vm550, %v551, %v450
        %v553 = vshrl.u32 %v552, 4
        %v554 = vand.u32 %v552, 15
        %v555 = vsub.s32 0, %v554
        %v556 = vsel %vm550, %v555, %v554
        %vm557 = vcmp.lt.s32.totalorder %v451, 0
        %v558 = vsub.s32 0, %v451
        %v559 = vsel %vm557, %v558, %v451
        %v560 = vshrl.u32 %v559, 4
        %v561 = vand.u32 %v559, 15
        %v562 = vsub.s32 0, %v561
        %v563 = vsel %vm557, %v562, %v561
        %vm564 = vcmp.ne.s32.totalorder %v458, 0
        %vm565 = vcmp.ne.s32.totalorder %v465, 0
        %vm566 = vcmp.ne.s32.totalorder %v472, 0
        %vm567 = vcmp.ne.s32.totalorder %v479, 0
        %vm568 = vcmp.ne.s32.totalorder %v486, 0
        %vm569 = vcmp.ne.s32.totalorder %v493, 0
        %vm570 = vcmp.ne.s32.totalorder %v500, 0
        %vm571 = vcmp.ne.s32.totalorder %v507, 0
        %vm572 = vcmp.ne.s32.totalorder %v514, 0
        %vm573 = vcmp.ne.s32.totalorder %v521, 0
        %vm574 = vcmp.ne.s32.totalorder %v528, 0
        %vm575 = vcmp.ne.s32.totalorder %v535, 0
        %vm576 = vcmp.ne.s32.totalorder %v542, 0
        %vm577 = vcmp.ne.s32.totalorder %v549, 0
        %vm578 = vcmp.ne.s32.totalorder %v556, 0
        %vm579 = vcmp.ne.s32.totalorder %v563, 0
        %vm580 = vcmp.lt.s32.totalorder %v458, 0
        %vm581 = vcmp.lt.s32.totalorder %v465, 0
        %vm582 = vcmp.lt.s32.totalorder %v472, 0
        %vm583 = vcmp.lt.s32.totalorder %v479, 0
        %vm584 = vcmp.lt.s32.totalorder %v486, 0
        %vm585 = vcmp.lt.s32.totalorder %v493, 0
        %vm586 = vcmp.lt.s32.totalorder %v500, 0
        %vm587 = vcmp.lt.s32.totalorder %v507, 0
        %vm588 = vcmp.lt.s32.totalorder %v514, 0
        %vm589 = vcmp.lt.s32.totalorder %v521, 0
        %vm590 = vcmp.lt.s32.totalorder %v528, 0
        %vm591 = vcmp.lt.s32.totalorder %v535, 0
        %vm592 = vcmp.lt.s32.totalorder %v542, 0
        %vm593 = vcmp.lt.s32.totalorder %v549, 0
        %vm594 = vcmp.lt.s32.totalorder %v556, 0
        %vm595 = vcmp.lt.s32.totalorder %v563, 0
        %vm596 = vmand %vm580, %vm564
        %vm597 = vmand %vm581, %vm565
        %vm598 = vmand %vm582, %vm566
        %vm599 = vmand %vm583, %vm567
        %vm600 = vmand %vm584, %vm568
        %vm601 = vmand %vm585, %vm569
        %vm602 = vmand %vm586, %vm570
        %vm603 = vmand %vm587, %vm571
        %vm604 = vmand %vm588, %vm572
        %vm605 = vmand %vm589, %vm573
        %vm606 = vmand %vm590, %vm574
        %vm607 = vmand %vm591, %vm575
        %vm608 = vmand %vm592, %vm576
        %vm609 = vmand %vm593, %vm577
        %vm610 = vmand %vm594, %vm578
        %vm611 = vmand %vm595, %vm579
        %v612 = vadd.s32 %v458, 16
        %v613 = vadd.s32 %v465, 16
        %v614 = vadd.s32 %v472, 16
        %v615 = vadd.s32 %v479, 16
        %v616 = vadd.s32 %v486, 16
        %v617 = vadd.s32 %v493, 16
        %v618 = vadd.s32 %v500, 16
        %v619 = vadd.s32 %v507, 16
        %v620 = vadd.s32 %v514, 16
        %v621 = vadd.s32 %v521, 16
        %v622 = vadd.s32 %v528, 16
        %v623 = vadd.s32 %v535, 16
        %v624 = vadd.s32 %v542, 16
        %v625 = vadd.s32 %v549, 16
        %v626 = vadd.s32 %v556, 16
        %v627 = vadd.s32 %v563, 16
        %v628 = vsel %vm596, %v612, %v458
        %v629 = vsel %vm597, %v613, %v465
        %v630 = vsel %vm598, %v614, %v472
        %v631 = vsel %vm599, %v615, %v479
        %v632 = vsel %vm600, %v616, %v486
        %v633 = vsel %vm601, %v617, %v493
        %v634 = vsel %vm602, %v618, %v500
        %v635 = vsel %vm603, %v619, %v507
        %v636 = vsel %vm604, %v620, %v514
        %v637 = vsel %vm605, %v621, %v521
        %v638 = vsel %vm606, %v622, %v528
        %v639 = vsel %vm607, %v623, %v535
        %v640 = vsel %vm608, %v624, %v542
        %v641 = vsel %vm609, %v625, %v549
        %v642 = vsel %vm610, %v626, %v556
        %v643 = vsel %vm611, %v627, %v563
        %vm644 = vcmp.eq.s32.totalorder %v628, 0
        %vm645 = vcmp.eq.s32.totalorder %v629, 0
        %vm646 = vcmp.eq.s32.totalorder %v630, 0
        %vm647 = vcmp.eq.s32.totalorder %v631, 0
        %vm648 = vcmp.eq.s32.totalorder %v632, 0
        %vm649 = vcmp.eq.s32.totalorder %v633, 0
        %vm650 = vcmp.eq.s32.totalorder %v634, 0
        %vm651 = vcmp.eq.s32.totalorder %v635, 0
        %vm652 = vcmp.eq.s32.totalorder %v636, 0
        %vm653 = vcmp.eq.s32.totalorder %v637, 0
        %vm654 = vcmp.eq.s32.totalorder %v638, 0
        %vm655 = vcmp.eq.s32.totalorder %v639, 0
        %vm656 = vcmp.eq.s32.totalorder %v640, 0
        %vm657 = vcmp.eq.s32.totalorder %v641, 0
        %vm658 = vcmp.eq.s32.totalorder %v642, 0
        %vm659 = vcmp.eq.s32.totalorder %v643, 0
        %vm660 = vcmp.eq.s32.totalorder %v628, 15
        %vm661 = vcmp.eq.s32.totalorder %v629, 15
        %vm662 = vcmp.eq.s32.totalorder %v630, 15
        %vm663 = vcmp.eq.s32.totalorder %v631, 15
        %vm664 = vcmp.eq.s32.totalorder %v632, 15
        %vm665 = vcmp.eq.s32.totalorder %v633, 15
        %vm666 = vcmp.eq.s32.totalorder %v634, 15
        %vm667 = vcmp.eq.s32.totalorder %v635, 15
        %vm668 = vcmp.eq.s32.totalorder %v636, 15
        %vm669 = vcmp.eq.s32.totalorder %v637, 15
        %vm670 = vcmp.eq.s32.totalorder %v638, 15
        %vm671 = vcmp.eq.s32.totalorder %v639, 15
        %vm672 = vcmp.eq.s32.totalorder %v640, 15
        %vm673 = vcmp.eq.s32.totalorder %v641, 15
        %vm674 = vcmp.eq.s32.totalorder %v642, 15
        %vm675 = vcmp.eq.s32.totalorder %v643, 15
        %v676 = vld [vmem:[%s353] sm:$0xff]
        %v677 = vld [vmem:[%s353 + $0x8] sm:$0xff]
        %v678 = vld [vmem:[%s353 + $0x10] sm:$0xff]
        %v679 = vld [vmem:[%s353 + $0x18] sm:$0xff]
        %v680 = vld [vmem:[%s353 + $0x20] sm:$0xff]
        %v681 = vld [vmem:[%s353 + $0x28] sm:$0xff]
        %v682 = vld [vmem:[%s353 + $0x30] sm:$0xff]
        %v683 = vld [vmem:[%s353 + $0x38] sm:$0xff]
        %v684 = vld [vmem:[%s353 + $0x40] sm:$0xff]
        %v685 = vld [vmem:[%s353 + $0x48] sm:$0xff]
        %v686 = vld [vmem:[%s353 + $0x50] sm:$0xff]
        %v687 = vld [vmem:[%s353 + $0x58] sm:$0xff]
        %v688 = vld [vmem:[%s353 + $0x60] sm:$0xff]
        %v689 = vld [vmem:[%s353 + $0x68] sm:$0xff]
        %v690 = vld [vmem:[%s353 + $0x70] sm:$0xff]
        %v691 = vld [vmem:[%s353 + $0x78] sm:$0xff]
        %v692 = vld [vmem:[%s362] sm:$0xff]
        %v693 = vld [vmem:[%s362 + $0x8] sm:$0xff]
        %v694 = vld [vmem:[%s362 + $0x10] sm:$0xff]
        %v695 = vld [vmem:[%s362 + $0x18] sm:$0xff]
        %v696 = vld [vmem:[%s362 + $0x20] sm:$0xff]
        %v697 = vld [vmem:[%s362 + $0x28] sm:$0xff]
        %v698 = vld [vmem:[%s362 + $0x30] sm:$0xff]
        %v699 = vld [vmem:[%s362 + $0x38] sm:$0xff]
        %v700 = vld [vmem:[%s362 + $0x40] sm:$0xff]
        %v701 = vld [vmem:[%s362 + $0x48] sm:$0xff]
        %v702 = vld [vmem:[%s362 + $0x50] sm:$0xff]
        %v703 = vld [vmem:[%s362 + $0x58] sm:$0xff]
        %v704 = vld [vmem:[%s362 + $0x60] sm:$0xff]
        %v705 = vld [vmem:[%s362 + $0x68] sm:$0xff]
        %v706 = vld [vmem:[%s362 + $0x70] sm:$0xff]
        %v707 = vld [vmem:[%s362 + $0x78] sm:$0xff]
        %v708 = vld [vmem:[%s371] sm:$0xff]
        %v709 = vld [vmem:[%s371 + $0x8] sm:$0xff]
        %v710 = vld [vmem:[%s371 + $0x10] sm:$0xff]
        %v711 = vld [vmem:[%s371 + $0x18] sm:$0xff]
        %v712 = vld [vmem:[%s371 + $0x20] sm:$0xff]
        %v713 = vld [vmem:[%s371 + $0x28] sm:$0xff]
        %v714 = vld [vmem:[%s371 + $0x30] sm:$0xff]
        %v715 = vld [vmem:[%s371 + $0x38] sm:$0xff]
        %v716 = vld [vmem:[%s371 + $0x40] sm:$0xff]
        %v717 = vld [vmem:[%s371 + $0x48] sm:$0xff]
        %v718 = vld [vmem:[%s371 + $0x50] sm:$0xff]
        %v719 = vld [vmem:[%s371 + $0x58] sm:$0xff]
        %v720 = vld [vmem:[%s371 + $0x60] sm:$0xff]
        %v721 = vld [vmem:[%s371 + $0x68] sm:$0xff]
        %v722 = vld [vmem:[%s371 + $0x70] sm:$0xff]
        %v723 = vld [vmem:[%s371 + $0x78] sm:$0xff]
        %v724 = vrot.slane %v692, 7
        %v725 = vrot.slane %v693, 7
        %v726 = vrot.slane %v694, 7
        %v727 = vrot.slane %v695, 7
        %v728 = vrot.slane %v696, 7
        %v729 = vrot.slane %v697, 7
        %v730 = vrot.slane %v698, 7
        %v731 = vrot.slane %v699, 7
        %v732 = vrot.slane %v700, 7
        %v733 = vrot.slane %v701, 7
        %v734 = vrot.slane %v702, 7
        %v735 = vrot.slane %v703, 7
        %v736 = vrot.slane %v704, 7
        %v737 = vrot.slane %v705, 7
        %v738 = vrot.slane %v706, 7
        %v739 = vrot.slane %v707, 7
        %vm740 = vcmp.lt.s32.totalorder %v436, 1
        %v741 = vsel %vm740, %v738, %v739
        %v742 = vsel %vm740, %v737, %v738
        %v743 = vsel %vm740, %v736, %v737
        %v744 = vsel %vm740, %v735, %v736
        %v745 = vsel %vm740, %v734, %v735
        %v746 = vsel %vm740, %v733, %v734
        %v747 = vsel %vm740, %v732, %v733
        %v748 = vsel %vm740, %v731, %v732
        %v749 = vsel %vm740, %v730, %v731
        %v750 = vsel %vm740, %v729, %v730
        %v751 = vsel %vm740, %v728, %v729
        %v752 = vsel %vm740, %v727, %v728
        %v753 = vsel %vm740, %v726, %v727
        %v754 = vsel %vm740, %v725, %v726
        %v755 = vsel %vm740, %v724, %v725
        %v756 = vsel %vm740, %v739, %v724
        %v757 = vsel %vm644, 1, 0
        %v758 = vsel %vm645, 1, 0
        %v759 = vsel %vm646, 1, 0
        %v760 = vsel %vm647, 1, 0
        %v761 = vsel %vm648, 1, 0
        %v762 = vsel %vm649, 1, 0
        %v763 = vsel %vm650, 1, 0
        %v764 = vsel %vm651, 1, 0
        %v765 = vsel %vm652, 1, 0
        %v766 = vsel %vm653, 1, 0
        %v767 = vsel %vm654, 1, 0
        %v768 = vsel %vm655, 1, 0
        %v769 = vsel %vm656, 1, 0
        %v770 = vsel %vm657, 1, 0
        %v771 = vsel %vm658, 1, 0
        %v772 = vsel %vm659, 1, 0
        %vm773 = vcmp.eq.s32.totalorder %v757, 1
        %vm774 = vcmp.eq.s32.totalorder %v758, 1
        %vm775 = vcmp.eq.s32.totalorder %v759, 1
        %vm776 = vcmp.eq.s32.totalorder %v760, 1
        %vm777 = vcmp.eq.s32.totalorder %v761, 1
        %vm778 = vcmp.eq.s32.totalorder %v762, 1
        %vm779 = vcmp.eq.s32.totalorder %v763, 1
        %vm780 = vcmp.eq.s32.totalorder %v764, 1
        %vm781 = vcmp.eq.s32.totalorder %v765, 1
        %vm782 = vcmp.eq.s32.totalorder %v766, 1
        %vm783 = vcmp.eq.s32.totalorder %v767, 1
        %vm784 = vcmp.eq.s32.totalorder %v768, 1
        %vm785 = vcmp.eq.s32.totalorder %v769, 1
        %vm786 = vcmp.eq.s32.totalorder %v770, 1
        %vm787 = vcmp.eq.s32.totalorder %v771, 1
        %vm788 = vcmp.eq.s32.totalorder %v772, 1
        %v789 = vsel %vm773, 0.0, %v756
        %v790 = vsel %vm774, 0.0, %v755
        %v791 = vsel %vm775, 0.0, %v754
        %v792 = vsel %vm776, 0.0, %v753
        %v793 = vsel %vm777, 0.0, %v752
        %v794 = vsel %vm778, 0.0, %v751
        %v795 = vsel %vm779, 0.0, %v750
        %v796 = vsel %vm780, 0.0, %v749
        %v797 = vsel %vm781, 0.0, %v748
        %v798 = vsel %vm782, 0.0, %v747
        %v799 = vsel %vm783, 0.0, %v746
        %v800 = vsel %vm784, 0.0, %v745
        %v801 = vsel %vm785, 0.0, %v744
        %v802 = vsel %vm786, 0.0, %v743
        %v803 = vsel %vm787, 0.0, %v742
        %v804 = vsel %vm788, 0.0, %v741
        %v805 = vrot.slane %v692, 1
        %v806 = vrot.slane %v693, 1
        %v807 = vrot.slane %v694, 1
        %v808 = vrot.slane %v695, 1
        %v809 = vrot.slane %v696, 1
        %v810 = vrot.slane %v697, 1
        %v811 = vrot.slane %v698, 1
        %v812 = vrot.slane %v699, 1
        %v813 = vrot.slane %v700, 1
        %v814 = vrot.slane %v701, 1
        %v815 = vrot.slane %v702, 1
        %v816 = vrot.slane %v703, 1
        %v817 = vrot.slane %v704, 1
        %v818 = vrot.slane %v705, 1
        %v819 = vrot.slane %v706, 1
        %v820 = vrot.slane %v707, 1
        %vm821 = vcmp.lt.s32.totalorder %v436, 7
        %v822 = vsel %vm821, %v819, %v820
        %v823 = vsel %vm821, %v818, %v819
        %v824 = vsel %vm821, %v817, %v818
        %v825 = vsel %vm821, %v816, %v817
        %v826 = vsel %vm821, %v815, %v816
        %v827 = vsel %vm821, %v814, %v815
        %v828 = vsel %vm821, %v813, %v814
        %v829 = vsel %vm821, %v812, %v813
        %v830 = vsel %vm821, %v811, %v812
        %v831 = vsel %vm821, %v810, %v811
        %v832 = vsel %vm821, %v809, %v810
        %v833 = vsel %vm821, %v808, %v809
        %v834 = vsel %vm821, %v807, %v808
        %v835 = vsel %vm821, %v806, %v807
        %v836 = vsel %vm821, %v805, %v806
        %v837 = vsel %vm821, %v820, %v805
        %v838 = vsel %vm660, 1, 0
        %v839 = vsel %vm661, 1, 0
        %v840 = vsel %vm662, 1, 0
        %v841 = vsel %vm663, 1, 0
        %v842 = vsel %vm664, 1, 0
        %v843 = vsel %vm665, 1, 0
        %v844 = vsel %vm666, 1, 0
        %v845 = vsel %vm667, 1, 0
        %v846 = vsel %vm668, 1, 0
        %v847 = vsel %vm669, 1, 0
        %v848 = vsel %vm670, 1, 0
        %v849 = vsel %vm671, 1, 0
        %v850 = vsel %vm672, 1, 0
        %v851 = vsel %vm673, 1, 0
        %v852 = vsel %vm674, 1, 0
        %v853 = vsel %vm675, 1, 0
        %vm854 = vcmp.eq.s32.totalorder %v838, 1
        %vm855 = vcmp.eq.s32.totalorder %v839, 1
        %vm856 = vcmp.eq.s32.totalorder %v840, 1
        %vm857 = vcmp.eq.s32.totalorder %v841, 1
        %vm858 = vcmp.eq.s32.totalorder %v842, 1
        %vm859 = vcmp.eq.s32.totalorder %v843, 1
        %vm860 = vcmp.eq.s32.totalorder %v844, 1
        %vm861 = vcmp.eq.s32.totalorder %v845, 1
        %vm862 = vcmp.eq.s32.totalorder %v846, 1
        %vm863 = vcmp.eq.s32.totalorder %v847, 1
        %vm864 = vcmp.eq.s32.totalorder %v848, 1
        %vm865 = vcmp.eq.s32.totalorder %v849, 1
        %vm866 = vcmp.eq.s32.totalorder %v850, 1
        %vm867 = vcmp.eq.s32.totalorder %v851, 1
        %vm868 = vcmp.eq.s32.totalorder %v852, 1
        %vm869 = vcmp.eq.s32.totalorder %v853, 1
        %v870 = vsel %vm854, 0.0, %v836
        %v871 = vsel %vm855, 0.0, %v835
        %v872 = vsel %vm856, 0.0, %v834
        %v873 = vsel %vm857, 0.0, %v833
        %v874 = vsel %vm858, 0.0, %v832
        %v875 = vsel %vm859, 0.0, %v831
        %v876 = vsel %vm860, 0.0, %v830
        %v877 = vsel %vm861, 0.0, %v829
        %v878 = vsel %vm862, 0.0, %v828
        %v879 = vsel %vm863, 0.0, %v827
        %v880 = vsel %vm864, 0.0, %v826
        %v881 = vsel %vm865, 0.0, %v825
        %v882 = vsel %vm866, 0.0, %v824
        %v883 = vsel %vm867, 0.0, %v823
        %v884 = vsel %vm868, 0.0, %v822
        %v885 = vsel %vm869, 0.0, %v837
        %v886 = vpack.c.bf16 %v790, %v789
        %v887 = vpack.c.bf16 %v693, %v692
        %v888 = vpack.c.bf16 %v871, %v870
        %v889 = vpack.c.bf16 %v792, %v791
        %v890 = vpack.c.bf16 %v695, %v694
        %v891 = vpack.c.bf16 %v873, %v872
        %v892 = vpack.c.bf16 %v794, %v793
        %v893 = vpack.c.bf16 %v697, %v696
        %v894 = vpack.c.bf16 %v875, %v874
        %v895 = vpack.c.bf16 %v796, %v795
        %v896 = vpack.c.bf16 %v699, %v698
        %v897 = vpack.c.bf16 %v877, %v876
        %v898 = vpack.c.bf16 %v798, %v797
        %v899 = vpack.c.bf16 %v701, %v700
        %v900 = vpack.c.bf16 %v879, %v878
        %v901 = vpack.c.bf16 %v800, %v799
        %v902 = vpack.c.bf16 %v703, %v702
        %v903 = vpack.c.bf16 %v881, %v880
        %v904 = vpack.c.bf16 %v802, %v801
        %v905 = vpack.c.bf16 %v705, %v704
        %v906 = vpack.c.bf16 %v883, %v882
        %v907 = vpack.c.bf16 %v804, %v803
        %v908 = vpack.c.bf16 %v707, %v706
        %v909 = vpack.c.bf16 %v885, %v884
        %v910 = vld [vmem:[#allocation8] sm:$0xf]
        %v911 = vld [vmem:[#allocation8 + $0x4] sm:$0xf]
        %v912 = vld [vmem:[#allocation8 + $0x8] sm:$0xf]
        %v913 = vld [vmem:[#allocation8 + $0xc] sm:$0xf]
        %v914 = vld [vmem:[#allocation8 + $0x10] sm:$0xf]
        %v915 = vld [vmem:[#allocation8 + $0x14] sm:$0xf]
        %v916 = vld [vmem:[#allocation8 + $0x18] sm:$0xf]
        %v917 = vld [vmem:[#allocation8 + $0x1c] sm:$0xf]
        %v918 = vld [vmem:[#allocation8 + $0x20] sm:$0xf]
        %v919 = vld [vmem:[#allocation8 + $0x24] sm:$0xf]
        %v920 = vld [vmem:[#allocation8 + $0x28] sm:$0xf]
        %v921 = vld [vmem:[#allocation8 + $0x2c] sm:$0xf]
        %v922 = vld [vmem:[#allocation8 + $0x30] sm:$0xf]
        %v923 = vld [vmem:[#allocation8 + $0x34] sm:$0xf]
        %v924 = vld [vmem:[#allocation8 + $0x38] sm:$0xf]
        %v925 = vld [vmem:[#allocation8 + $0x3c] sm:$0xf]
        %v926 = vld [vmem:[#allocation8 + $0x40] sm:$0xf]
        %v927 = vld [vmem:[#allocation8 + $0x44] sm:$0xf]
        %v928 = vld [vmem:[#allocation8 + $0x48] sm:$0xf]
        %v929 = vld [vmem:[#allocation8 + $0x4c] sm:$0xf]
        %v930 = vld [vmem:[#allocation8 + $0x50] sm:$0xf]
        %v931 = vld [vmem:[#allocation8 + $0x54] sm:$0xf]
        %v932 = vld [vmem:[#allocation8 + $0x58] sm:$0xf]
        %v933 = vld [vmem:[#allocation8 + $0x5c] sm:$0xf]
        %v934 = vld [vmem:[#allocation8 + $0x60] sm:$0xf]
        %v935 = vld [vmem:[#allocation8 + $0x64] sm:$0xf]
        %v936 = vld [vmem:[#allocation8 + $0x68] sm:$0xf]
        %v937 = vld [vmem:[#allocation8 + $0x6c] sm:$0xf]
        %v938 = vld [vmem:[#allocation8 + $0x70] sm:$0xf]
        %v939 = vld [vmem:[#allocation8 + $0x74] sm:$0xf]
        %v940 = vld [vmem:[#allocation8 + $0x78] sm:$0xf]
        %v941 = vld [vmem:[#allocation8 + $0x7c] sm:$0xf]
        %v942 = vld [vmem:[#allocation8 + $0x80] sm:$0xf]
        %v943 = vld [vmem:[#allocation8 + $0x84] sm:$0xf]
        %v944 = vld [vmem:[#allocation8 + $0x88] sm:$0xf]
        %v945 = vld [vmem:[#allocation8 + $0x8c] sm:$0xf]
        %v946 = vld [vmem:[#allocation8 + $0x90] sm:$0xf]
        %v947 = vld [vmem:[#allocation8 + $0x94] sm:$0xf]
        %v948 = vld [vmem:[#allocation8 + $0x98] sm:$0xf]
        %v949 = vld [vmem:[#allocation8 + $0x9c] sm:$0xf]
        %v950 = vld [vmem:[#allocation8 + $0xa0] sm:$0xf]
        %v951 = vld [vmem:[#allocation8 + $0xa4] sm:$0xf]
        %v952 = vld [vmem:[#allocation8 + $0xa8] sm:$0xf]
        %v953 = vld [vmem:[#allocation8 + $0xac] sm:$0xf]
        %v954 = vld [vmem:[#allocation8 + $0xb0] sm:$0xf]
        %v955 = vld [vmem:[#allocation8 + $0xb4] sm:$0xf]
        %v956 = vld [vmem:[#allocation8 + $0xb8] sm:$0xf]
        %v957 = vld [vmem:[#allocation8 + $0xbc] sm:$0xf]
        %v1006 = vunpack.c.l.b16 %v910
        %v1007 = vunpack.c.l.b16 %v911
        %v1008 = vunpack.c.l.b16 %v912
        %v1009 = vunpack.c.l.b16 %v913
        %v1010 = vunpack.c.l.b16 %v914
        %v1011 = vunpack.c.l.b16 %v915
        %v1012 = vunpack.c.l.b16 %v916
        %v1013 = vunpack.c.l.b16 %v917
        %v1014 = vunpack.c.l.b16 %v918
        %v1015 = vunpack.c.l.b16 %v919
        %v1016 = vunpack.c.l.b16 %v920
        %v1017 = vunpack.c.l.b16 %v921
        %v1018 = vunpack.c.l.b16 %v922
        %v1019 = vunpack.c.l.b16 %v923
        %v1020 = vunpack.c.l.b16 %v924
        %v1021 = vunpack.c.l.b16 %v925
        %v1022 = vunpack.c.l.b16 %v926
        %v1023 = vunpack.c.l.b16 %v927
        %v1024 = vunpack.c.l.b16 %v928
        %v1025 = vunpack.c.l.b16 %v929
        %v1026 = vunpack.c.l.b16 %v930
        %v1027 = vunpack.c.l.b16 %v931
        %v1028 = vunpack.c.l.b16 %v932
        %v1029 = vunpack.c.l.b16 %v933
        %v1030 = vunpack.c.l.b16 %v934
        %v1031 = vunpack.c.l.b16 %v935
        %v1032 = vunpack.c.l.b16 %v936
        %v1033 = vunpack.c.l.b16 %v937
        %v1034 = vunpack.c.l.b16 %v938
        %v1035 = vunpack.c.l.b16 %v939
        %v1036 = vunpack.c.l.b16 %v940
        %v1037 = vunpack.c.l.b16 %v941
        %v1038 = vunpack.c.l.b16 %v942
        %v1039 = vunpack.c.l.b16 %v943
        %v1040 = vunpack.c.l.b16 %v944
        %v1041 = vunpack.c.l.b16 %v945
        %v1042 = vunpack.c.l.b16 %v946
        %v1043 = vunpack.c.l.b16 %v947
        %v1044 = vunpack.c.l.b16 %v948
        %v1045 = vunpack.c.l.b16 %v949
        %v1046 = vunpack.c.l.b16 %v950
        %v1047 = vunpack.c.l.b16 %v951
        %v1048 = vunpack.c.l.b16 %v952
        %v1049 = vunpack.c.l.b16 %v953
        %v1050 = vunpack.c.l.b16 %v954
        %v1051 = vunpack.c.l.b16 %v955
        %v1052 = vunpack.c.l.b16 %v956
        %v1053 = vunpack.c.l.b16 %v957
        %v1054 = vpack.c.b16 %v1007, %v1006
        %v1055 = vpack.c.b16 %v1009, %v1008
        %v1056 = vpack.c.b16 %v1011, %v1010
        %v1057 = vpack.c.b16 %v1013, %v1012
        %v1058 = vpack.c.b16 %v1015, %v1014
        %v1059 = vpack.c.b16 %v1017, %v1016
        %v1060 = vpack.c.b16 %v1019, %v1018
        %v1061 = vpack.c.b16 %v1021, %v1020
        %v1062 = vpack.c.b16 %v1023, %v1022
        %v1063 = vpack.c.b16 %v1025, %v1024
        %v1064 = vpack.c.b16 %v1027, %v1026
        %v1065 = vpack.c.b16 %v1029, %v1028
        %v1066 = vpack.c.b16 %v1031, %v1030
        %v1067 = vpack.c.b16 %v1033, %v1032
        %v1068 = vpack.c.b16 %v1035, %v1034
        %v1069 = vpack.c.b16 %v1037, %v1036
        %v1070 = vpack.c.b16 %v1039, %v1038
        %v1071 = vpack.c.b16 %v1041, %v1040
        %v1072 = vpack.c.b16 %v1043, %v1042
        %v1073 = vpack.c.b16 %v1045, %v1044
        %v1074 = vpack.c.b16 %v1047, %v1046
        %v1075 = vpack.c.b16 %v1049, %v1048
        %v1076 = vpack.c.b16 %v1051, %v1050
        %v1077 = vpack.c.b16 %v1053, %v1052
        %1102 = vmatprep.subr.bf16.mxu0 0
        %1103 = vmatpush1.bf16.msra.mxu0 %v1054
        %1104 = vmatprep.subr.bf16.mxu0 0
        %1105 = vmatpush1.bf16.msra.mxu0 %v1055
        %1106 = vmatprep.subr.bf16.mxu0 0
        %1107 = vmatpush1.bf16.msra.mxu0 %v1056
        %1108 = vmatprep.subr.bf16.mxu0 0
        %1109 = vmatpush1.bf16.msra.mxu0 %v1057
        %1110 = vmatprep.subr.bf16.mxu0 0
        %1111 = vmatpush1.bf16.msra.mxu0 %v1058
        %1112 = vmatprep.subr.bf16.mxu0 0
        %1113 = vmatpush1.bf16.msra.mxu0 %v1059
        %1114 = vmatprep.subr.bf16.mxu0 0
        %1115 = vmatpush1.bf16.msra.mxu0 %v1060
        %1116 = vmatprep.subr.bf16.mxu0 0
        %1117 = vmatpush1.bf16.msra.mxu0 %v1061
        %1118 = vmatprep.subr.bf16.mxu0 0
        %1119 = vmatpush1.bf16.msra.mxu0 %v1062
        %1120 = vmatprep.subr.bf16.mxu0 0
        %1121 = vmatpush1.bf16.msra.mxu0 %v1063
        %1122 = vmatprep.subr.bf16.mxu0 0
        %1123 = vmatpush1.bf16.msra.mxu0 %v1064
        %1124 = vmatprep.subr.bf16.mxu0 0
        %1125 = vmatpush1.bf16.msra.mxu0 %v1065
        %1126 = vmatprep.subr.bf16.mxu0 0
        %1127 = vmatpush1.bf16.msra.mxu0 %v1066
        %1128 = vmatprep.subr.bf16.mxu0 0
        %1129 = vmatpush1.bf16.msra.mxu0 %v1067
        %1130 = vmatprep.subr.bf16.mxu0 0
        %1131 = vmatpush1.bf16.msra.mxu0 %v1068
        %1132 = vmatprep.subr.bf16.mxu0 0
        %1133 = vmatpush1.bf16.msra.mxu0 %v1069
        %1134 = vmatprep.mubr.bf16.mxu0 %v887
        %1135 = vmatmul.mubr.bf16.gmra.mrb[0].mxu0 %v886
        %v1136 = vpop.f32.mrb[0].mxu0
        %v1137 = vadd.f32 0.0, %v1136
        %v1138 = vpop.f32.mrb[0].mxu0
        %v1139 = vpop.f32.mrb[0].mxu0
        %v1140 = vadd.f32 0.0, %v1139
        %v1141 = vpop.f32.mrb[0].mxu0
        %1142 = vmatprep.mubr.bf16.mxu0 %v890
        %1143 = vmatmul.mubr.bf16.gmra.mrb[0].mxu0 %v889
        %v1144 = vpop.f32.mrb[0].mxu0
        %v1145 = vadd.f32 0.0, %v1144
        %v1146 = vpop.f32.mrb[0].mxu0
        %v1147 = vpop.f32.mrb[0].mxu0
        %v1148 = vadd.f32 0.0, %v1147
        %v1149 = vpop.f32.mrb[0].mxu0
        %1150 = vmatprep.mubr.bf16.mxu0 %v893
        %1151 = vmatmul.mubr.bf16.gmra.mrb[0].mxu0 %v892
        %v1152 = vpop.f32.mrb[0].mxu0
        %v1153 = vadd.f32 0.0, %v1152
        %v1154 = vpop.f32.mrb[0].mxu0
        %v1155 = vpop.f32.mrb[0].mxu0
        %v1156 = vadd.f32 0.0, %v1155
        %v1157 = vpop.f32.mrb[0].mxu0
        %1158 = vmatprep.mubr.bf16.mxu0 %v896
        %1159 = vmatmul.mubr.bf16.gmra.mrb[0].mxu0 %v895
        %v1160 = vpop.f32.mrb[0].mxu0
        %v1161 = vadd.f32 0.0, %v1160
        %v1162 = vpop.f32.mrb[0].mxu0
        %v1163 = vpop.f32.mrb[0].mxu0
        %v1164 = vadd.f32 0.0, %v1163
        %v1165 = vpop.f32.mrb[0].mxu0
        %1166 = vmatprep.mubr.bf16.mxu0 %v899
        %1167 = vmatmul.mubr.bf16.gmra.mrb[0].mxu0 %v898
        %v1168 = vpop.f32.mrb[0].mxu0
        %v1169 = vadd.f32 0.0, %v1168
        %v1170 = vpop.f32.mrb[0].mxu0
        %v1171 = vpop.f32.mrb[0].mxu0
        %v1172 = vadd.f32 0.0, %v1171
        %v1173 = vpop.f32.mrb[0].mxu0
        %1174 = vmatprep.mubr.bf16.mxu0 %v902
        %1175 = vmatmul.mubr.bf16.gmra.mrb[0].mxu0 %v901
        %v1176 = vpop.f32.mrb[0].mxu0
        %v1177 = vadd.f32 0.0, %v1176
        %v1178 = vpop.f32.mrb[0].mxu0
        %v1179 = vpop.f32.mrb[0].mxu0
        %v1180 = vadd.f32 0.0, %v1179
        %v1181 = vpop.f32.mrb[0].mxu0
        %1182 = vmatprep.mubr.bf16.mxu0 %v905
        %1183 = vmatmul.mubr.bf16.gmra.mrb[0].mxu0 %v904
        %v1184 = vpop.f32.mrb[0].mxu0
        %v1185 = vadd.f32 0.0, %v1184
        %v1186 = vpop.f32.mrb[0].mxu0
        %v1187 = vpop.f32.mrb[0].mxu0
        %v1188 = vadd.f32 0.0, %v1187
        %v1189 = vpop.f32.mrb[0].mxu0
        %1190 = vmatprep.mubr.bf16.mxu0 %v908
        %1191 = vmatmul.mubr.bf16.gmra.mrb[0].mxu0 %v907
        %v1192 = vpop.f32.mrb[0].mxu0
        %v1193 = vadd.f32 0.0, %v1192
        %v1194 = vpop.f32.mrb[0].mxu0
        %v1195 = vpop.f32.mrb[0].mxu0
        %v1196 = vadd.f32 0.0, %v1195
        %v1197 = vpop.f32.mrb[0].mxu0
        %1198 = vdwg.mxu0
        %1199 = vmatprep.subr.bf16.mxu0 0
        %1200 = vmatpush1.bf16.msra.mxu0 %v1070
        %1201 = vmatprep.subr.bf16.mxu0 0
        %1202 = vmatpush1.bf16.msra.mxu0 %v1071
        %1203 = vmatprep.subr.bf16.mxu0 0
        %1204 = vmatpush1.bf16.msra.mxu0 %v1072
        %1205 = vmatprep.subr.bf16.mxu0 0
        %1206 = vmatpush1.bf16.msra.mxu0 %v1073
        %1207 = vmatprep.subr.bf16.mxu0 0
        %1208 = vmatpush1.bf16.msra.mxu0 %v1074
        %1209 = vmatprep.subr.bf16.mxu0 0
        %1210 = vmatpush1.bf16.msra.mxu0 %v1075
        %1211 = vmatprep.subr.bf16.mxu0 0
        %1212 = vmatpush1.bf16.msra.mxu0 %v1076
        %1213 = vmatprep.subr.bf16.mxu0 0
        %1214 = vmatpush1.bf16.msra.mxu0 %v1077
        %1215 = vmatprep.subr.bf16.mxu0 0
        %1216 = vmatpush1.bf16.msra.mxu0 0
        %1217 = vmatprep.subr.bf16.mxu0 0
        %1218 = vmatpush1.bf16.msra.mxu0 0
        %1219 = vmatprep.subr.bf16.mxu0 0
        %1220 = vmatpush1.bf16.msra.mxu0 0
        %1221 = vmatprep.subr.bf16.mxu0 0
        %1222 = vmatpush1.bf16.msra.mxu0 0
        %1223 = vmatprep.subr.bf16.mxu0 0
        %1224 = vmatpush1.bf16.msra.mxu0 0
        %1225 = vmatprep.subr.bf16.mxu0 0
        %1226 = vmatpush1.bf16.msra.mxu0 0
        %1227 = vmatprep.subr.bf16.mxu0 0
        %1228 = vmatpush1.bf16.msra.mxu0 0
        %1229 = vmatprep.subr.bf16.mxu0 0
        %1230 = vmatpush1.bf16.msra.mxu0 0
        %1231 = vmatprep.mubr.bf16.mxu0 0
        %1232 = vmatmul.mubr.bf16.gmra.mrb[0].mxu0 %v888
        %v1233 = vpop.f32.mrb[0].mxu0
        %v1234 = vadd.f32 %v1137, %v1233
        %v1235 = vpop.f32.mrb[0].mxu0
        %v1236 = vpop.f32.mrb[0].mxu0
        %v1237 = vadd.f32 %v1140, %v1236
        %v1238 = vpop.f32.mrb[0].mxu0
        %1239 = vmatprep.mubr.bf16.mxu0 0
        %1240 = vmatmul.mubr.bf16.gmra.mrb[0].mxu0 %v891
        %v1241 = vpop.f32.mrb[0].mxu0
        %v1242 = vadd.f32 %v1145, %v1241
        %v1243 = vpop.f32.mrb[0].mxu0
        %v1244 = vpop.f32.mrb[0].mxu0
        %v1245 = vadd.f32 %v1148, %v1244
        %v1246 = vpop.f32.mrb[0].mxu0
        %1247 = vmatprep.mubr.bf16.mxu0 0
        %1248 = vmatmul.mubr.bf16.gmra.mrb[0].mxu0 %v894
        %v1249 = vpop.f32.mrb[0].mxu0
        %v1250 = vadd.f32 %v1153, %v1249
        %v1251 = vpop.f32.mrb[0].mxu0
        %v1252 = vpop.f32.mrb[0].mxu0
        %v1253 = vadd.f32 %v1156, %v1252
        %v1254 = vpop.f32.mrb[0].mxu0
        %1255 = vmatprep.mubr.bf16.mxu0 0
        %1256 = vmatmul.mubr.bf16.gmra.mrb[0].mxu0 %v897
        %v1257 = vpop.f32.mrb[0].mxu0
        %v1258 = vadd.f32 %v1161, %v1257
        %v1259 = vpop.f32.mrb[0].mxu0
        %v1260 = vpop.f32.mrb[0].mxu0
        %v1261 = vadd.f32 %v1164, %v1260
        %v1262 = vpop.f32.mrb[0].mxu0
        %1263 = vmatprep.mubr.bf16.mxu0 0
        %1264 = vmatmul.mubr.bf16.gmra.mrb[0].mxu0 %v900
        %v1265 = vpop.f32.mrb[0].mxu0
        %v1266 = vadd.f32 %v1169, %v1265
        %v1267 = vpop.f32.mrb[0].mxu0
        %v1268 = vpop.f32.mrb[0].mxu0
        %v1269 = vadd.f32 %v1172, %v1268
        %v1270 = vpop.f32.mrb[0].mxu0
        %1271 = vmatprep.mubr.bf16.mxu0 0
        %1272 = vmatmul.mubr.bf16.gmra.mrb[0].mxu0 %v903
        %v1273 = vpop.f32.mrb[0].mxu0
        %v1274 = vadd.f32 %v1177, %v1273
        %v1275 = vpop.f32.mrb[0].mxu0
        %v1276 = vpop.f32.mrb[0].mxu0
        %v1277 = vadd.f32 %v1180, %v1276
        %v1278 = vpop.f32.mrb[0].mxu0
        %1279 = vmatprep.mubr.bf16.mxu0 0
        %1280 = vmatmul.mubr.bf16.gmra.mrb[0].mxu0 %v906
        %v1281 = vpop.f32.mrb[0].mxu0
        %v1282 = vadd.f32 %v1185, %v1281
        %v1283 = vpop.f32.mrb[0].mxu0
        %v1284 = vpop.f32.mrb[0].mxu0
        %v1285 = vadd.f32 %v1188, %v1284
        %v1286 = vpop.f32.mrb[0].mxu0
        %1287 = vmatprep.mubr.bf16.mxu0 0
        %1288 = vmatmul.mubr.bf16.gmra.mrb[0].mxu0 %v909
        %v1289 = vpop.f32.mrb[0].mxu0
        %v1290 = vadd.f32 %v1193, %v1289
        %v1291 = vpop.f32.mrb[0].mxu0
        %v1292 = vpop.f32.mrb[0].mxu0
        %v1293 = vadd.f32 %v1196, %v1292
        %v1294 = vpop.f32.mrb[0].mxu0
        %1295 = vdwg.mxu0
        %v1296 = vadd.f32 %v676, %v1234
        %v1297 = vadd.f32 %v677, %v1237
        %v1298 = vadd.f32 %v678, %v1242
        %v1299 = vadd.f32 %v679, %v1245
        %v1300 = vadd.f32 %v680, %v1250
        %v1301 = vadd.f32 %v681, %v1253
        %v1302 = vadd.f32 %v682, %v1258
        %v1303 = vadd.f32 %v683, %v1261
        %v1304 = vadd.f32 %v684, %v1266
        %v1305 = vadd.f32 %v685, %v1269
        %v1306 = vadd.f32 %v686, %v1274
        %v1307 = vadd.f32 %v687, %v1277
        %v1308 = vadd.f32 %v688, %v1282
        %v1309 = vadd.f32 %v689, %v1285
        %v1310 = vadd.f32 %v690, %v1290
        %v1311 = vadd.f32 %v691, %v1293
        %v1312 = vrot.slane %v1296, 7
        %v1313 = vrot.slane %v1297, 7
        %v1314 = vrot.slane %v1298, 7
        %v1315 = vrot.slane %v1299, 7
        %v1316 = vrot.slane %v1300, 7
        %v1317 = vrot.slane %v1301, 7
        %v1318 = vrot.slane %v1302, 7
        %v1319 = vrot.slane %v1303, 7
        %v1320 = vrot.slane %v1304, 7
        %v1321 = vrot.slane %v1305, 7
        %v1322 = vrot.slane %v1306, 7
        %v1323 = vrot.slane %v1307, 7
        %v1324 = vrot.slane %v1308, 7
        %v1325 = vrot.slane %v1309, 7
        %v1326 = vrot.slane %v1310, 7
        %v1327 = vrot.slane %v1311, 7
        %v1328 = vsel %vm740, %v1326, %v1327
        %v1329 = vsel %vm740, %v1325, %v1326
        %v1330 = vsel %vm740, %v1324, %v1325
        %v1331 = vsel %vm740, %v1323, %v1324
        %v1332 = vsel %vm740, %v1322, %v1323
        %v1333 = vsel %vm740, %v1321, %v1322
        %v1334 = vsel %vm740, %v1320, %v1321
        %v1335 = vsel %vm740, %v1319, %v1320
        %v1336 = vsel %vm740, %v1318, %v1319
        %v1337 = vsel %vm740, %v1317, %v1318
        %v1338 = vsel %vm740, %v1316, %v1317
        %v1339 = vsel %vm740, %v1315, %v1316
        %v1340 = vsel %vm740, %v1314, %v1315
        %v1341 = vsel %vm740, %v1313, %v1314
        %v1342 = vsel %vm740, %v1312, %v1313
        %v1343 = vsel %vm740, %v1327, %v1312
        %v1344 = vsel %vm773, 0.0, %v1343
        %v1345 = vsel %vm774, 0.0, %v1342
        %v1346 = vsel %vm775, 0.0, %v1341
        %v1347 = vsel %vm776, 0.0, %v1340
        %v1348 = vsel %vm777, 0.0, %v1339
        %v1349 = vsel %vm778, 0.0, %v1338
        %v1350 = vsel %vm779, 0.0, %v1337
        %v1351 = vsel %vm780, 0.0, %v1336
        %v1352 = vsel %vm781, 0.0, %v1335
        %v1353 = vsel %vm782, 0.0, %v1334
        %v1354 = vsel %vm783, 0.0, %v1333
        %v1355 = vsel %vm784, 0.0, %v1332
        %v1356 = vsel %vm785, 0.0, %v1331
        %v1357 = vsel %vm786, 0.0, %v1330
        %v1358 = vsel %vm787, 0.0, %v1329
        %v1359 = vsel %vm788, 0.0, %v1328
        %v1360 = vrot.slane %v1296, 1
        %v1361 = vrot.slane %v1297, 1
        %v1362 = vrot.slane %v1298, 1
        %v1363 = vrot.slane %v1299, 1
        %v1364 = vrot.slane %v1300, 1
        %v1365 = vrot.slane %v1301, 1
        %v1366 = vrot.slane %v1302, 1
        %v1367 = vrot.slane %v1303, 1
        %v1368 = vrot.slane %v1304, 1
        %v1369 = vrot.slane %v1305, 1
        %v1370 = vrot.slane %v1306, 1
        %v1371 = vrot.slane %v1307, 1
        %v1372 = vrot.slane %v1308, 1
        %v1373 = vrot.slane %v1309, 1
        %v1374 = vrot.slane %v1310, 1
        %v1375 = vrot.slane %v1311, 1
        %v1376 = vsel %vm821, %v1374, %v1375
        %v1377 = vsel %vm821, %v1373, %v1374
        %v1378 = vsel %vm821, %v1372, %v1373
        %v1379 = vsel %vm821, %v1371, %v1372
        %v1380 = vsel %vm821, %v1370, %v1371
        %v1381 = vsel %vm821, %v1369, %v1370
        %v1382 = vsel %vm821, %v1368, %v1369
        %v1383 = vsel %vm821, %v1367, %v1368
        %v1384 = vsel %vm821, %v1366, %v1367
        %v1385 = vsel %vm821, %v1365, %v1366
        %v1386 = vsel %vm821, %v1364, %v1365
        %v1387 = vsel %vm821, %v1363, %v1364
        %v1388 = vsel %vm821, %v1362, %v1363
        %v1389 = vsel %vm821, %v1361, %v1362
        %v1390 = vsel %vm821, %v1360, %v1361
        %v1391 = vsel %vm821, %v1375, %v1360
        %v1392 = vsel %vm854, 0.0, %v1390
        %v1393 = vsel %vm855, 0.0, %v1389
        %v1394 = vsel %vm856, 0.0, %v1388
        %v1395 = vsel %vm857, 0.0, %v1387
        %v1396 = vsel %vm858, 0.0, %v1386
        %v1397 = vsel %vm859, 0.0, %v1385
        %v1398 = vsel %vm860, 0.0, %v1384
        %v1399 = vsel %vm861, 0.0, %v1383
        %v1400 = vsel %vm862, 0.0, %v1382
        %v1401 = vsel %vm863, 0.0, %v1381
        %v1402 = vsel %vm864, 0.0, %v1380
        %v1403 = vsel %vm865, 0.0, %v1379
        %v1404 = vsel %vm866, 0.0, %v1378
        %v1405 = vsel %vm867, 0.0, %v1377
        %v1406 = vsel %vm868, 0.0, %v1376
        %v1407 = vsel %vm869, 0.0, %v1391
        %v1408 = vpack.c.bf16 %v1345, %v1344
        %v1409 = vpack.c.bf16 %v1297, %v1296
        %v1410 = vpack.c.bf16 %v1393, %v1392
        %v1411 = vpack.c.bf16 %v1347, %v1346
        %v1412 = vpack.c.bf16 %v1299, %v1298
        %v1413 = vpack.c.bf16 %v1395, %v1394
        %v1414 = vpack.c.bf16 %v1349, %v1348
        %v1415 = vpack.c.bf16 %v1301, %v1300
        %v1416 = vpack.c.bf16 %v1397, %v1396
        %v1417 = vpack.c.bf16 %v1351, %v1350
        %v1418 = vpack.c.bf16 %v1303, %v1302
        %v1419 = vpack.c.bf16 %v1399, %v1398
        %v1420 = vpack.c.bf16 %v1353, %v1352
        %v1421 = vpack.c.bf16 %v1305, %v1304
        %v1422 = vpack.c.bf16 %v1401, %v1400
        %v1423 = vpack.c.bf16 %v1355, %v1354
        %v1424 = vpack.c.bf16 %v1307, %v1306
        %v1425 = vpack.c.bf16 %v1403, %v1402
        %v1426 = vpack.c.bf16 %v1357, %v1356
        %v1427 = vpack.c.bf16 %v1309, %v1308
        %v1428 = vpack.c.bf16 %v1405, %v1404
        %v1429 = vpack.c.bf16 %v1359, %v1358
        %v1430 = vpack.c.bf16 %v1311, %v1310
        %v1431 = vpack.c.bf16 %v1407, %v1406
        %v1432 = vld [vmem:[#allocation10] sm:$0xff]
        %v1433 = vld [vmem:[#allocation10 + $0x8] sm:$0xff]
        %v1434 = vld [vmem:[#allocation10 + $0x10] sm:$0xff]
        %v1435 = vld [vmem:[#allocation10 + $0x18] sm:$0xff]
        %v1436 = vld [vmem:[#allocation10 + $0x20] sm:$0xff]
        %v1437 = vld [vmem:[#allocation10 + $0x28] sm:$0xff]
        %v1438 = vld [vmem:[#allocation10 + $0x30] sm:$0xff]
        %v1439 = vld [vmem:[#allocation10 + $0x38] sm:$0xff]
        %v1440 = vld [vmem:[#allocation10 + $0x40] sm:$0xff]
        %v1441 = vld [vmem:[#allocation10 + $0x48] sm:$0xff]
        %v1442 = vld [vmem:[#allocation10 + $0x50] sm:$0xff]
        %v1443 = vld [vmem:[#allocation10 + $0x58] sm:$0xff]
        %v1444 = vld [vmem:[#allocation10 + $0x60] sm:$0xff]
        %v1445 = vld [vmem:[#allocation10 + $0x68] sm:$0xff]
        %v1446 = vld [vmem:[#allocation10 + $0x70] sm:$0xff]
        %v1447 = vld [vmem:[#allocation10 + $0x78] sm:$0xff]
        %v1448 = vld [vmem:[#allocation10 + $0x80] sm:$0xff]
        %v1449 = vld [vmem:[#allocation10 + $0x88] sm:$0xff]
        %v1450 = vld [vmem:[#allocation10 + $0x90] sm:$0xff]
        %v1451 = vld [vmem:[#allocation10 + $0x98] sm:$0xff]
        %v1452 = vld [vmem:[#allocation10 + $0xa0] sm:$0xff]
        %v1453 = vld [vmem:[#allocation10 + $0xa8] sm:$0xff]
        %v1454 = vld [vmem:[#allocation10 + $0xb0] sm:$0xff]
        %v1455 = vld [vmem:[#allocation10 + $0xb8] sm:$0xff]
        %v1456 = vld [vmem:[#allocation10 + $0xc0] sm:$0xff]
        %v1457 = vld [vmem:[#allocation10 + $0xc8] sm:$0xff]
        %v1458 = vld [vmem:[#allocation10 + $0xd0] sm:$0xff]
        %v1459 = vld [vmem:[#allocation10 + $0xd8] sm:$0xff]
        %v1460 = vld [vmem:[#allocation10 + $0xe0] sm:$0xff]
        %v1461 = vld [vmem:[#allocation10 + $0xe8] sm:$0xff]
        %v1462 = vld [vmem:[#allocation10 + $0xf0] sm:$0xff]
        %v1463 = vld [vmem:[#allocation10 + $0xf8] sm:$0xff]
        %v1464 = vld [vmem:[#allocation10 + $0x100] sm:$0xff]
        %v1465 = vld [vmem:[#allocation10 + $0x108] sm:$0xff]
        %v1466 = vld [vmem:[#allocation10 + $0x110] sm:$0xff]
        %v1467 = vld [vmem:[#allocation10 + $0x118] sm:$0xff]
        %v1468 = vld [vmem:[#allocation10 + $0x120] sm:$0xff]
        %v1469 = vld [vmem:[#allocation10 + $0x128] sm:$0xff]
        %v1470 = vld [vmem:[#allocation10 + $0x130] sm:$0xff]
        %v1471 = vld [vmem:[#allocation10 + $0x138] sm:$0xff]
        %v1472 = vld [vmem:[#allocation10 + $0x140] sm:$0xff]
        %v1473 = vld [vmem:[#allocation10 + $0x148] sm:$0xff]
        %v1474 = vld [vmem:[#allocation10 + $0x150] sm:$0xff]
        %v1475 = vld [vmem:[#allocation10 + $0x158] sm:$0xff]
        %v1476 = vld [vmem:[#allocation10 + $0x160] sm:$0xff]
        %v1477 = vld [vmem:[#allocation10 + $0x168] sm:$0xff]
        %v1478 = vld [vmem:[#allocation10 + $0x170] sm:$0xff]
        %v1479 = vld [vmem:[#allocation10 + $0x178] sm:$0xff]
        %v1480 = vld [vmem:[#allocation10 + $0x180] sm:$0xff]
        %v1481 = vld [vmem:[#allocation10 + $0x188] sm:$0xff]
        %v1482 = vld [vmem:[#allocation10 + $0x190] sm:$0xff]
        %v1483 = vld [vmem:[#allocation10 + $0x198] sm:$0xff]
        %v1484 = vld [vmem:[#allocation10 + $0x1a0] sm:$0xff]
        %v1485 = vld [vmem:[#allocation10 + $0x1a8] sm:$0xff]
        %v1486 = vld [vmem:[#allocation10 + $0x1b0] sm:$0xff]
        %v1487 = vld [vmem:[#allocation10 + $0x1b8] sm:$0xff]
        %v1488 = vld [vmem:[#allocation10 + $0x1c0] sm:$0xff]
        %v1489 = vld [vmem:[#allocation10 + $0x1c8] sm:$0xff]
        %v1490 = vld [vmem:[#allocation10 + $0x1d0] sm:$0xff]
        %v1491 = vld [vmem:[#allocation10 + $0x1d8] sm:$0xff]
        %v1492 = vld [vmem:[#allocation10 + $0x1e0] sm:$0xff]
        %v1493 = vld [vmem:[#allocation10 + $0x1e8] sm:$0xff]
        %v1494 = vld [vmem:[#allocation10 + $0x1f0] sm:$0xff]
        %v1495 = vld [vmem:[#allocation10 + $0x1f8] sm:$0xff]
        %v1496 = vld [vmem:[#allocation10 + $0x200] sm:$0xff]
        %v1497 = vld [vmem:[#allocation10 + $0x208] sm:$0xff]
        %v1498 = vld [vmem:[#allocation10 + $0x210] sm:$0xff]
        %v1499 = vld [vmem:[#allocation10 + $0x218] sm:$0xff]
        %v1500 = vld [vmem:[#allocation10 + $0x220] sm:$0xff]
        %v1501 = vld [vmem:[#allocation10 + $0x228] sm:$0xff]
        %v1502 = vld [vmem:[#allocation10 + $0x230] sm:$0xff]
        %v1503 = vld [vmem:[#allocation10 + $0x238] sm:$0xff]
        %v1504 = vld [vmem:[#allocation10 + $0x240] sm:$0xff]
        %v1505 = vld [vmem:[#allocation10 + $0x248] sm:$0xff]
        %v1506 = vld [vmem:[#allocation10 + $0x250] sm:$0xff]
        %v1507 = vld [vmem:[#allocation10 + $0x258] sm:$0xff]
        %v1508 = vld [vmem:[#allocation10 + $0x260] sm:$0xff]
        %v1509 = vld [vmem:[#allocation10 + $0x268] sm:$0xff]
        %v1510 = vld [vmem:[#allocation10 + $0x270] sm:$0xff]
        %v1511 = vld [vmem:[#allocation10 + $0x278] sm:$0xff]
        %v1512 = vld [vmem:[#allocation10 + $0x280] sm:$0xff]
        %v1513 = vld [vmem:[#allocation10 + $0x288] sm:$0xff]
        %v1514 = vld [vmem:[#allocation10 + $0x290] sm:$0xff]
        %v1515 = vld [vmem:[#allocation10 + $0x298] sm:$0xff]
        %v1516 = vld [vmem:[#allocation10 + $0x2a0] sm:$0xff]
        %v1517 = vld [vmem:[#allocation10 + $0x2a8] sm:$0xff]
        %v1518 = vld [vmem:[#allocation10 + $0x2b0] sm:$0xff]
        %v1519 = vld [vmem:[#allocation10 + $0x2b8] sm:$0xff]
        %v1520 = vld [vmem:[#allocation10 + $0x2c0] sm:$0xff]
        %v1521 = vld [vmem:[#allocation10 + $0x2c8] sm:$0xff]
        %v1522 = vld [vmem:[#allocation10 + $0x2d0] sm:$0xff]
        %v1523 = vld [vmem:[#allocation10 + $0x2d8] sm:$0xff]
        %v1524 = vld [vmem:[#allocation10 + $0x2e0] sm:$0xff]
        %v1525 = vld [vmem:[#allocation10 + $0x2e8] sm:$0xff]
        %v1526 = vld [vmem:[#allocation10 + $0x2f0] sm:$0xff]
        %v1527 = vld [vmem:[#allocation10 + $0x2f8] sm:$0xff]
        %v1528 = vld [vmem:[#allocation11] sm:$0xff]
        %v1529 = vld [vmem:[#allocation11 + $0x8] sm:$0xff]
        %v1530 = vld [vmem:[#allocation11 + $0x10] sm:$0xff]
        %v1531 = vld [vmem:[#allocation11 + $0x18] sm:$0xff]
        %v1532 = vld [vmem:[#allocation11 + $0x20] sm:$0xff]
        %v1533 = vld [vmem:[#allocation11 + $0x28] sm:$0xff]
        %v1534 = vld [vmem:[#allocation11 + $0x30] sm:$0xff]
        %v1535 = vld [vmem:[#allocation11 + $0x38] sm:$0xff]
        %v1536 = vld [vmem:[#allocation11 + $0x40] sm:$0xff]
        %v1537 = vld [vmem:[#allocation11 + $0x48] sm:$0xff]
        %v1538 = vld [vmem:[#allocation11 + $0x50] sm:$0xff]
        %v1539 = vld [vmem:[#allocation11 + $0x58] sm:$0xff]
        %v1540 = vld [vmem:[#allocation11 + $0x60] sm:$0xff]
        %v1541 = vld [vmem:[#allocation11 + $0x68] sm:$0xff]
        %v1542 = vld [vmem:[#allocation11 + $0x70] sm:$0xff]
        %v1543 = vld [vmem:[#allocation11 + $0x78] sm:$0xff]
        %v1544 = vld [vmem:[#allocation11 + $0x80] sm:$0xff]
        %v1545 = vld [vmem:[#allocation11 + $0x88] sm:$0xff]
        %v1546 = vld [vmem:[#allocation11 + $0x90] sm:$0xff]
        %v1547 = vld [vmem:[#allocation11 + $0x98] sm:$0xff]
        %v1548 = vld [vmem:[#allocation11 + $0xa0] sm:$0xff]
        %v1549 = vld [vmem:[#allocation11 + $0xa8] sm:$0xff]
        %v1550 = vld [vmem:[#allocation11 + $0xb0] sm:$0xff]
        %v1551 = vld [vmem:[#allocation11 + $0xb8] sm:$0xff]
        %v1552 = vld [vmem:[#allocation11 + $0xc0] sm:$0xff]
        %v1553 = vld [vmem:[#allocation11 + $0xc8] sm:$0xff]
        %v1554 = vld [vmem:[#allocation11 + $0xd0] sm:$0xff]
        %v1555 = vld [vmem:[#allocation11 + $0xd8] sm:$0xff]
        %v1556 = vld [vmem:[#allocation11 + $0xe0] sm:$0xff]
        %v1557 = vld [vmem:[#allocation11 + $0xe8] sm:$0xff]
        %v1558 = vld [vmem:[#allocation11 + $0xf0] sm:$0xff]
        %v1559 = vld [vmem:[#allocation11 + $0xf8] sm:$0xff]
        %v1560 = vld [vmem:[#allocation11 + $0x100] sm:$0xff]
        %v1561 = vld [vmem:[#allocation11 + $0x108] sm:$0xff]
        %v1562 = vld [vmem:[#allocation11 + $0x110] sm:$0xff]
        %v1563 = vld [vmem:[#allocation11 + $0x118] sm:$0xff]
        %v1564 = vld [vmem:[#allocation11 + $0x120] sm:$0xff]
        %v1565 = vld [vmem:[#allocation11 + $0x128] sm:$0xff]
        %v1566 = vld [vmem:[#allocation11 + $0x130] sm:$0xff]
        %v1567 = vld [vmem:[#allocation11 + $0x138] sm:$0xff]
        %v1568 = vld [vmem:[#allocation11 + $0x140] sm:$0xff]
        %v1569 = vld [vmem:[#allocation11 + $0x148] sm:$0xff]
        %v1570 = vld [vmem:[#allocation11 + $0x150] sm:$0xff]
        %v1571 = vld [vmem:[#allocation11 + $0x158] sm:$0xff]
        %v1572 = vld [vmem:[#allocation11 + $0x160] sm:$0xff]
        %v1573 = vld [vmem:[#allocation11 + $0x168] sm:$0xff]
        %v1574 = vld [vmem:[#allocation11 + $0x170] sm:$0xff]
        %v1575 = vld [vmem:[#allocation11 + $0x178] sm:$0xff]
        %v1576 = vld [vmem:[#allocation11 + $0x180] sm:$0xff]
        %v1577 = vld [vmem:[#allocation11 + $0x188] sm:$0xff]
        %v1578 = vld [vmem:[#allocation11 + $0x190] sm:$0xff]
        %v1579 = vld [vmem:[#allocation11 + $0x198] sm:$0xff]
        %v1580 = vld [vmem:[#allocation11 + $0x1a0] sm:$0xff]
        %v1581 = vld [vmem:[#allocation11 + $0x1a8] sm:$0xff]
        %v1582 = vld [vmem:[#allocation11 + $0x1b0] sm:$0xff]
        %v1583 = vld [vmem:[#allocation11 + $0x1b8] sm:$0xff]
        %v1584 = vld [vmem:[#allocation11 + $0x1c0] sm:$0xff]
        %v1585 = vld [vmem:[#allocation11 + $0x1c8] sm:$0xff]
        %v1586 = vld [vmem:[#allocation11 + $0x1d0] sm:$0xff]
        %v1587 = vld [vmem:[#allocation11 + $0x1d8] sm:$0xff]
        %v1588 = vld [vmem:[#allocation11 + $0x1e0] sm:$0xff]
        %v1589 = vld [vmem:[#allocation11 + $0x1e8] sm:$0xff]
        %v1590 = vld [vmem:[#allocation11 + $0x1f0] sm:$0xff]
        %v1591 = vld [vmem:[#allocation11 + $0x1f8] sm:$0xff]
        %v1688 = vunpack.c.l.b16 %v1432
        %v1689 = vunpack.c.h.b16 %v1432
        %v1690 = vunpack.c.l.b16 %v1433
        %v1691 = vunpack.c.h.b16 %v1433
        %v1692 = vunpack.c.l.b16 %v1434
        %v1693 = vunpack.c.h.b16 %v1434
        %v1694 = vunpack.c.l.b16 %v1435
        %v1695 = vunpack.c.h.b16 %v1435
        %v1696 = vunpack.c.l.b16 %v1436
        %v1697 = vunpack.c.h.b16 %v1436
        %v1698 = vunpack.c.l.b16 %v1437
        %v1699 = vunpack.c.h.b16 %v1437
        %v1700 = vunpack.c.l.b16 %v1438
        %v1701 = vunpack.c.h.b16 %v1438
        %v1702 = vunpack.c.l.b16 %v1439
        %v1703 = vunpack.c.h.b16 %v1439
        %v1704 = vunpack.c.l.b16 %v1440
        %v1705 = vunpack.c.h.b16 %v1440
        %v1706 = vunpack.c.l.b16 %v1441
        %v1707 = vunpack.c.h.b16 %v1441
        %v1708 = vunpack.c.l.b16 %v1442
        %v1709 = vunpack.c.h.b16 %v1442
        %v1710 = vunpack.c.l.b16 %v1443
        %v1711 = vunpack.c.h.b16 %v1443
        %v1712 = vunpack.c.l.b16 %v1444
        %v1713 = vunpack.c.h.b16 %v1444
        %v1714 = vunpack.c.l.b16 %v1445
        %v1715 = vunpack.c.h.b16 %v1445
        %v1716 = vunpack.c.l.b16 %v1446
        %v1717 = vunpack.c.h.b16 %v1446
        %v1718 = vunpack.c.l.b16 %v1447
        %v1719 = vunpack.c.h.b16 %v1447
        %v1720 = vunpack.c.l.b16 %v1448
        %v1721 = vunpack.c.h.b16 %v1448
        %v1722 = vunpack.c.l.b16 %v1449
        %v1723 = vunpack.c.h.b16 %v1449
        %v1724 = vunpack.c.l.b16 %v1450
        %v1725 = vunpack.c.h.b16 %v1450
        %v1726 = vunpack.c.l.b16 %v1451
        %v1727 = vunpack.c.h.b16 %v1451
        %v1728 = vunpack.c.l.b16 %v1452
        %v1729 = vunpack.c.h.b16 %v1452
        %v1730 = vunpack.c.l.b16 %v1453
        %v1731 = vunpack.c.h.b16 %v1453
        %v1732 = vunpack.c.l.b16 %v1454
        %v1733 = vunpack.c.h.b16 %v1454
        %v1734 = vunpack.c.l.b16 %v1455
        %v1735 = vunpack.c.h.b16 %v1455
        %v1736 = vunpack.c.l.b16 %v1456
        %v1737 = vunpack.c.h.b16 %v1456
        %v1738 = vunpack.c.l.b16 %v1457
        %v1739 = vunpack.c.h.b16 %v1457
        %v1740 = vunpack.c.l.b16 %v1458
        %v1741 = vunpack.c.h.b16 %v1458
        %v1742 = vunpack.c.l.b16 %v1459
        %v1743 = vunpack.c.h.b16 %v1459
        %v1744 = vunpack.c.l.b16 %v1460
        %v1745 = vunpack.c.h.b16 %v1460
        %v1746 = vunpack.c.l.b16 %v1461
        %v1747 = vunpack.c.h.b16 %v1461
        %v1748 = vunpack.c.l.b16 %v1462
        %v1749 = vunpack.c.h.b16 %v1462
        %v1750 = vunpack.c.l.b16 %v1463
        %v1751 = vunpack.c.h.b16 %v1463
        %v1752 = vunpack.c.l.b16 %v1464
        %v1753 = vunpack.c.h.b16 %v1464
        %v1754 = vunpack.c.l.b16 %v1465
        %v1755 = vunpack.c.h.b16 %v1465
        %v1756 = vunpack.c.l.b16 %v1466
        %v1757 = vunpack.c.h.b16 %v1466
        %v1758 = vunpack.c.l.b16 %v1467
        %v1759 = vunpack.c.h.b16 %v1467
        %v1760 = vunpack.c.l.b16 %v1468
        %v1761 = vunpack.c.h.b16 %v1468
        %v1762 = vunpack.c.l.b16 %v1469
        %v1763 = vunpack.c.h.b16 %v1469
        %v1764 = vunpack.c.l.b16 %v1470
        %v1765 = vunpack.c.h.b16 %v1470
        %v1766 = vunpack.c.l.b16 %v1471
        %v1767 = vunpack.c.h.b16 %v1471
        %v1768 = vunpack.c.l.b16 %v1472
        %v1769 = vunpack.c.h.b16 %v1472
        %v1770 = vunpack.c.l.b16 %v1473
        %v1771 = vunpack.c.h.b16 %v1473
        %v1772 = vunpack.c.l.b16 %v1474
        %v1773 = vunpack.c.h.b16 %v1474
        %v1774 = vunpack.c.l.b16 %v1475
        %v1775 = vunpack.c.h.b16 %v1475
        %v1776 = vunpack.c.l.b16 %v1476
        %v1777 = vunpack.c.h.b16 %v1476
        %v1778 = vunpack.c.l.b16 %v1477
        %v1779 = vunpack.c.h.b16 %v1477
        %v1780 = vunpack.c.l.b16 %v1478
        %v1781 = vunpack.c.h.b16 %v1478
        %v1782 = vunpack.c.l.b16 %v1479
        %v1783 = vunpack.c.h.b16 %v1479
        %v1784 = vunpack.c.l.b16 %v1480
        %v1785 = vunpack.c.h.b16 %v1480
        %v1786 = vunpack.c.l.b16 %v1481
        %v1787 = vunpack.c.h.b16 %v1481
        %v1788 = vunpack.c.l.b16 %v1482
        %v1789 = vunpack.c.h.b16 %v1482
        %v1790 = vunpack.c.l.b16 %v1483
        %v1791 = vunpack.c.h.b16 %v1483
        %v1792 = vunpack.c.l.b16 %v1484
        %v1793 = vunpack.c.h.b16 %v1484
        %v1794 = vunpack.c.l.b16 %v1485
        %v1795 = vunpack.c.h.b16 %v1485
        %v1796 = vunpack.c.l.b16 %v1486
        %v1797 = vunpack.c.h.b16 %v1486
        %v1798 = vunpack.c.l.b16 %v1487
        %v1799 = vunpack.c.h.b16 %v1487
        %v1800 = vunpack.c.l.b16 %v1488
        %v1801 = vunpack.c.h.b16 %v1488
        %v1802 = vunpack.c.l.b16 %v1489
        %v1803 = vunpack.c.h.b16 %v1489
        %v1804 = vunpack.c.l.b16 %v1490
        %v1805 = vunpack.c.h.b16 %v1490
        %v1806 = vunpack.c.l.b16 %v1491
        %v1807 = vunpack.c.h.b16 %v1491
        %v1808 = vunpack.c.l.b16 %v1492
        %v1809 = vunpack.c.h.b16 %v1492
        %v1810 = vunpack.c.l.b16 %v1493
        %v1811 = vunpack.c.h.b16 %v1493
        %v1812 = vunpack.c.l.b16 %v1494
        %v1813 = vunpack.c.h.b16 %v1494
        %v1814 = vunpack.c.l.b16 %v1495
        %v1815 = vunpack.c.h.b16 %v1495
        %v1816 = vunpack.c.l.b16 %v1496
        %v1817 = vunpack.c.h.b16 %v1496
        %v1818 = vunpack.c.l.b16 %v1497
        %v1819 = vunpack.c.h.b16 %v1497
        %v1820 = vunpack.c.l.b16 %v1498
        %v1821 = vunpack.c.h.b16 %v1498
        %v1822 = vunpack.c.l.b16 %v1499
        %v1823 = vunpack.c.h.b16 %v1499
        %v1824 = vunpack.c.l.b16 %v1500
        %v1825 = vunpack.c.h.b16 %v1500
        %v1826 = vunpack.c.l.b16 %v1501
        %v1827 = vunpack.c.h.b16 %v1501
        %v1828 = vunpack.c.l.b16 %v1502
        %v1829 = vunpack.c.h.b16 %v1502
        %v1830 = vunpack.c.l.b16 %v1503
        %v1831 = vunpack.c.h.b16 %v1503
        %v1832 = vunpack.c.l.b16 %v1504
        %v1833 = vunpack.c.h.b16 %v1504
        %v1834 = vunpack.c.l.b16 %v1505
        %v1835 = vunpack.c.h.b16 %v1505
        %v1836 = vunpack.c.l.b16 %v1506
        %v1837 = vunpack.c.h.b16 %v1506
        %v1838 = vunpack.c.l.b16 %v1507
        %v1839 = vunpack.c.h.b16 %v1507
        %v1840 = vunpack.c.l.b16 %v1508
        %v1841 = vunpack.c.h.b16 %v1508
        %v1842 = vunpack.c.l.b16 %v1509
        %v1843 = vunpack.c.h.b16 %v1509
        %v1844 = vunpack.c.l.b16 %v1510
        %v1845 = vunpack.c.h.b16 %v1510
        %v1846 = vunpack.c.l.b16 %v1511
        %v1847 = vunpack.c.h.b16 %v1511
        %v1848 = vunpack.c.l.b16 %v1512
        %v1849 = vunpack.c.h.b16 %v1512
        %v1850 = vunpack.c.l.b16 %v1513
        %v1851 = vunpack.c.h.b16 %v1513
        %v1852 = vunpack.c.l.b16 %v1514
        %v1853 = vunpack.c.h.b16 %v1514
        %v1854 = vunpack.c.l.b16 %v1515
        %v1855 = vunpack.c.h.b16 %v1515
        %v1856 = vunpack.c.l.b16 %v1516
        %v1857 = vunpack.c.h.b16 %v1516
        %v1858 = vunpack.c.l.b16 %v1517
        %v1859 = vunpack.c.h.b16 %v1517
        %v1860 = vunpack.c.l.b16 %v1518
        %v1861 = vunpack.c.h.b16 %v1518
        %v1862 = vunpack.c.l.b16 %v1519
        %v1863 = vunpack.c.h.b16 %v1519
        %v1864 = vunpack.c.l.b16 %v1520
        %v1865 = vunpack.c.h.b16 %v1520
        %v1866 = vunpack.c.l.b16 %v1521
        %v1867 = vunpack.c.h.b16 %v1521
        %v1868 = vunpack.c.l.b16 %v1522
        %v1869 = vunpack.c.h.b16 %v1522
        %v1870 = vunpack.c.l.b16 %v1523
        %v1871 = vunpack.c.h.b16 %v1523
        %v1872 = vunpack.c.l.b16 %v1524
        %v1873 = vunpack.c.h.b16 %v1524
        %v1874 = vunpack.c.l.b16 %v1525
        %v1875 = vunpack.c.h.b16 %v1525
        %v1876 = vunpack.c.l.b16 %v1526
        %v1877 = vunpack.c.h.b16 %v1526
        %v1878 = vunpack.c.l.b16 %v1527
        %v1879 = vunpack.c.h.b16 %v1527
        %v1880 = vpack.c.b16 %v1692, %v1688
        %v1881 = vpack.c.b16 %v1693, %v1689
        %v1882 = vpack.c.b16 %v1694, %v1690
        %v1883 = vpack.c.b16 %v1695, %v1691
        %v1884 = vpack.c.b16 %v1700, %v1696
        %v1885 = vpack.c.b16 %v1701, %v1697
        %v1886 = vpack.c.b16 %v1702, %v1698
        %v1887 = vpack.c.b16 %v1703, %v1699
        %v1888 = vpack.c.b16 %v1708, %v1704
        %v1889 = vpack.c.b16 %v1709, %v1705
        %v1890 = vpack.c.b16 %v1710, %v1706
        %v1891 = vpack.c.b16 %v1711, %v1707
        %v1892 = vpack.c.b16 %v1716, %v1712
        %v1893 = vpack.c.b16 %v1717, %v1713
        %v1894 = vpack.c.b16 %v1718, %v1714
        %v1895 = vpack.c.b16 %v1719, %v1715
        %v1896 = vpack.c.b16 %v1724, %v1720
        %v1897 = vpack.c.b16 %v1725, %v1721
        %v1898 = vpack.c.b16 %v1726, %v1722
        %v1899 = vpack.c.b16 %v1727, %v1723
        %v1900 = vpack.c.b16 %v1732, %v1728
        %v1901 = vpack.c.b16 %v1733, %v1729
        %v1902 = vpack.c.b16 %v1734, %v1730
        %v1903 = vpack.c.b16 %v1735, %v1731
        %v1904 = vpack.c.b16 %v1740, %v1736
        %v1905 = vpack.c.b16 %v1741, %v1737
        %v1906 = vpack.c.b16 %v1742, %v1738
        %v1907 = vpack.c.b16 %v1743, %v1739
        %v1908 = vpack.c.b16 %v1748, %v1744
        %v1909 = vpack.c.b16 %v1749, %v1745
        %v1910 = vpack.c.b16 %v1750, %v1746
        %v1911 = vpack.c.b16 %v1751, %v1747
        %v1912 = vpack.c.b16 %v1756, %v1752
        %v1913 = vpack.c.b16 %v1757, %v1753
        %v1914 = vpack.c.b16 %v1758, %v1754
        %v1915 = vpack.c.b16 %v1759, %v1755
        %v1916 = vpack.c.b16 %v1764, %v1760
        %v1917 = vpack.c.b16 %v1765, %v1761
        %v1918 = vpack.c.b16 %v1766, %v1762
        %v1919 = vpack.c.b16 %v1767, %v1763
        %v1920 = vpack.c.b16 %v1772, %v1768
        %v1921 = vpack.c.b16 %v1773, %v1769
        %v1922 = vpack.c.b16 %v1774, %v1770
        %v1923 = vpack.c.b16 %v1775, %v1771
        %v1924 = vpack.c.b16 %v1780, %v1776
        %v1925 = vpack.c.b16 %v1781, %v1777
        %v1926 = vpack.c.b16 %v1782, %v1778
        %v1927 = vpack.c.b16 %v1783, %v1779
        %v1928 = vpack.c.b16 %v1788, %v1784
        %v1929 = vpack.c.b16 %v1789, %v1785
        %v1930 = vpack.c.b16 %v1790, %v1786
        %v1931 = vpack.c.b16 %v1791, %v1787
        %v1932 = vpack.c.b16 %v1796, %v1792
        %v1933 = vpack.c.b16 %v1797, %v1793
        %v1934 = vpack.c.b16 %v1798, %v1794
        %v1935 = vpack.c.b16 %v1799, %v1795
        %v1936 = vpack.c.b16 %v1804, %v1800
        %v1937 = vpack.c.b16 %v1805, %v1801
        %v1938 = vpack.c.b16 %v1806, %v1802
        %v1939 = vpack.c.b16 %v1807, %v1803
        %v1940 = vpack.c.b16 %v1812, %v1808
        %v1941 = vpack.c.b16 %v1813, %v1809
        %v1942 = vpack.c.b16 %v1814, %v1810
        %v1943 = vpack.c.b16 %v1815, %v1811
        %v1944 = vpack.c.b16 %v1820, %v1816
        %v1945 = vpack.c.b16 %v1821, %v1817
        %v1946 = vpack.c.b16 %v1822, %v1818
        %v1947 = vpack.c.b16 %v1823, %v1819
        %v1948 = vpack.c.b16 %v1828, %v1824
        %v1949 = vpack.c.b16 %v1829, %v1825
        %v1950 = vpack.c.b16 %v1830, %v1826
        %v1951 = vpack.c.b16 %v1831, %v1827
        %v1952 = vpack.c.b16 %v1836, %v1832
        %v1953 = vpack.c.b16 %v1837, %v1833
        %v1954 = vpack.c.b16 %v1838, %v1834
        %v1955 = vpack.c.b16 %v1839, %v1835
        %v1956 = vpack.c.b16 %v1844, %v1840
        %v1957 = vpack.c.b16 %v1845, %v1841
        %v1958 = vpack.c.b16 %v1846, %v1842
        %v1959 = vpack.c.b16 %v1847, %v1843
        %v1960 = vpack.c.b16 %v1852, %v1848
        %v1961 = vpack.c.b16 %v1853, %v1849
        %v1962 = vpack.c.b16 %v1854, %v1850
        %v1963 = vpack.c.b16 %v1855, %v1851
        %v1964 = vpack.c.b16 %v1860, %v1856
        %v1965 = vpack.c.b16 %v1861, %v1857
        %v1966 = vpack.c.b16 %v1862, %v1858
        %v1967 = vpack.c.b16 %v1863, %v1859
        %v1968 = vpack.c.b16 %v1868, %v1864
        %v1969 = vpack.c.b16 %v1869, %v1865
        %v1970 = vpack.c.b16 %v1870, %v1866
        %v1971 = vpack.c.b16 %v1871, %v1867
        %v1972 = vpack.c.b16 %v1876, %v1872
        %v1973 = vpack.c.b16 %v1877, %v1873
        %v1974 = vpack.c.b16 %v1878, %v1874
        %v1975 = vpack.c.b16 %v1879, %v1875
        %2072 = vmatprep.subr.bf16.mxu0 %v1881
        %2073 = vmatpush1.bf16.msra.mxu0 %v1880
        %2074 = vmatprep.subr.bf16.mxu0 %v1885
        %2075 = vmatpush1.bf16.msra.mxu0 %v1884
        %2076 = vmatprep.subr.bf16.mxu0 %v1889
        %2077 = vmatpush1.bf16.msra.mxu0 %v1888
        %2078 = vmatprep.subr.bf16.mxu0 %v1893
        %2079 = vmatpush1.bf16.msra.mxu0 %v1892
        %2080 = vmatprep.subr.bf16.mxu0 %v1897
        %2081 = vmatpush1.bf16.msra.mxu0 %v1896
        %2082 = vmatprep.subr.bf16.mxu0 %v1901
        %2083 = vmatpush1.bf16.msra.mxu0 %v1900
        %2084 = vmatprep.subr.bf16.mxu0 %v1905
        %2085 = vmatpush1.bf16.msra.mxu0 %v1904
        %2086 = vmatprep.subr.bf16.mxu0 %v1909
        %2087 = vmatpush1.bf16.msra.mxu0 %v1908
        %2088 = vmatprep.subr.bf16.mxu0 %v1913
        %2089 = vmatpush1.bf16.msra.mxu0 %v1912
        %2090 = vmatprep.subr.bf16.mxu0 %v1917
        %2091 = vmatpush1.bf16.msra.mxu0 %v1916
        %2092 = vmatprep.subr.bf16.mxu0 %v1921
        %2093 = vmatpush1.bf16.msra.mxu0 %v1920
        %2094 = vmatprep.subr.bf16.mxu0 %v1925
        %2095 = vmatpush1.bf16.msra.mxu0 %v1924
        %2096 = vmatprep.subr.bf16.mxu0 %v1929
        %2097 = vmatpush1.bf16.msra.mxu0 %v1928
        %2098 = vmatprep.subr.bf16.mxu0 %v1933
        %2099 = vmatpush1.bf16.msra.mxu0 %v1932
        %2100 = vmatprep.subr.bf16.mxu0 %v1937
        %2101 = vmatpush1.bf16.msra.mxu0 %v1936
        %2102 = vmatprep.subr.bf16.mxu0 %v1941
        %2103 = vmatpush1.bf16.msra.mxu0 %v1940
        %2104 = vmatprep.mubr.bf16.mxu0 %v1409
        %2105 = vmatmul.mubr.bf16.gmra.mrb[0].mxu0 %v1408
        %v2106 = vpop.f32.mrb[0].mxu0
        %v2107 = vadd.f32 %v1528, %v2106
        %v2108 = vpop.f32.mrb[0].mxu0
        %v2109 = vadd.f32 %v1529, %v2108
        %v2110 = vpop.f32.mrb[0].mxu0
        %v2111 = vadd.f32 %v1532, %v2110
        %v2112 = vpop.f32.mrb[0].mxu0
        %v2113 = vadd.f32 %v1533, %v2112
        %2114 = vmatprep.mubr.bf16.mxu0 %v1412
        %2115 = vmatmul.mubr.bf16.gmra.mrb[0].mxu0 %v1411
        %v2116 = vpop.f32.mrb[0].mxu0
        %v2117 = vadd.f32 %v1536, %v2116
        %v2118 = vpop.f32.mrb[0].mxu0
        %v2119 = vadd.f32 %v1537, %v2118
        %v2120 = vpop.f32.mrb[0].mxu0
        %v2121 = vadd.f32 %v1540, %v2120
        %v2122 = vpop.f32.mrb[0].mxu0
        %v2123 = vadd.f32 %v1541, %v2122
        %2124 = vmatprep.mubr.bf16.mxu0 %v1415
        %2125 = vmatmul.mubr.bf16.gmra.mrb[0].mxu0 %v1414
        %v2126 = vpop.f32.mrb[0].mxu0
        %v2127 = vadd.f32 %v1544, %v2126
        %v2128 = vpop.f32.mrb[0].mxu0
        %v2129 = vadd.f32 %v1545, %v2128
        %v2130 = vpop.f32.mrb[0].mxu0
        %v2131 = vadd.f32 %v1548, %v2130
        %v2132 = vpop.f32.mrb[0].mxu0
        %v2133 = vadd.f32 %v1549, %v2132
        %2134 = vmatprep.mubr.bf16.mxu0 %v1418
        %2135 = vmatmul.mubr.bf16.gmra.mrb[0].mxu0 %v1417
        %v2136 = vpop.f32.mrb[0].mxu0
        %v2137 = vadd.f32 %v1552, %v2136
        %v2138 = vpop.f32.mrb[0].mxu0
        %v2139 = vadd.f32 %v1553, %v2138
        %v2140 = vpop.f32.mrb[0].mxu0
        %v2141 = vadd.f32 %v1556, %v2140
        %v2142 = vpop.f32.mrb[0].mxu0
        %v2143 = vadd.f32 %v1557, %v2142
        %2144 = vmatprep.mubr.bf16.mxu0 %v1421
        %2145 = vmatmul.mubr.bf16.gmra.mrb[0].mxu0 %v1420
        %v2146 = vpop.f32.mrb[0].mxu0
        %v2147 = vadd.f32 %v1560, %v2146
        %v2148 = vpop.f32.mrb[0].mxu0
        %v2149 = vadd.f32 %v1561, %v2148
        %v2150 = vpop.f32.mrb[0].mxu0
        %v2151 = vadd.f32 %v1564, %v2150
        %v2152 = vpop.f32.mrb[0].mxu0
        %v2153 = vadd.f32 %v1565, %v2152
        %2154 = vmatprep.mubr.bf16.mxu0 %v1424
        %2155 = vmatmul.mubr.bf16.gmra.mrb[0].mxu0 %v1423
        %v2156 = vpop.f32.mrb[0].mxu0
        %v2157 = vadd.f32 %v1568, %v2156
        %v2158 = vpop.f32.mrb[0].mxu0
        %v2159 = vadd.f32 %v1569, %v2158
        %v2160 = vpop.f32.mrb[0].mxu0
        %v2161 = vadd.f32 %v1572, %v2160
        %v2162 = vpop.f32.mrb[0].mxu0
        %v2163 = vadd.f32 %v1573, %v2162
        %2164 = vmatprep.mubr.bf16.mxu0 %v1427
        %2165 = vmatmul.mubr.bf16.gmra.mrb[0].mxu0 %v1426
        %v2166 = vpop.f32.mrb[0].mxu0
        %v2167 = vadd.f32 %v1576, %v2166
        %v2168 = vpop.f32.mrb[0].mxu0
        %v2169 = vadd.f32 %v1577, %v2168
        %v2170 = vpop.f32.mrb[0].mxu0
        %v2171 = vadd.f32 %v1580, %v2170
        %v2172 = vpop.f32.mrb[0].mxu0
        %v2173 = vadd.f32 %v1581, %v2172
        %2174 = vmatprep.mubr.bf16.mxu0 %v1430
        %2175 = vmatmul.mubr.bf16.gmra.mrb[0].mxu0 %v1429
        %v2176 = vpop.f32.mrb[0].mxu0
        %v2177 = vadd.f32 %v1584, %v2176
        %v2178 = vpop.f32.mrb[0].mxu0
        %v2179 = vadd.f32 %v1585, %v2178
        %v2180 = vpop.f32.mrb[0].mxu0
        %v2181 = vadd.f32 %v1588, %v2180
        %v2182 = vpop.f32.mrb[0].mxu0
        %v2183 = vadd.f32 %v1589, %v2182
        %2184 = vdwg.mxu0
        %2185 = vmatprep.subr.bf16.mxu0 %v1945
        %2186 = vmatpush1.bf16.msra.mxu0 %v1944
        %2187 = vmatprep.subr.bf16.mxu0 %v1949
        %2188 = vmatpush1.bf16.msra.mxu0 %v1948
        %2189 = vmatprep.subr.bf16.mxu0 %v1953
        %2190 = vmatpush1.bf16.msra.mxu0 %v1952
        %2191 = vmatprep.subr.bf16.mxu0 %v1957
        %2192 = vmatpush1.bf16.msra.mxu0 %v1956
        %2193 = vmatprep.subr.bf16.mxu0 %v1961
        %2194 = vmatpush1.bf16.msra.mxu0 %v1960
        %2195 = vmatprep.subr.bf16.mxu0 %v1965
        %2196 = vmatpush1.bf16.msra.mxu0 %v1964
        %2197 = vmatprep.subr.bf16.mxu0 %v1969
        %2198 = vmatpush1.bf16.msra.mxu0 %v1968
        %2199 = vmatprep.subr.bf16.mxu0 %v1973
        %2200 = vmatpush1.bf16.msra.mxu0 %v1972
        %2201 = vmatprep.subr.bf16.mxu0 0
        %2202 = vmatpush1.bf16.msra.mxu0 0
        %2203 = vmatprep.subr.bf16.mxu0 0
        %2204 = vmatpush1.bf16.msra.mxu0 0
        %2205 = vmatprep.subr.bf16.mxu0 0
        %2206 = vmatpush1.bf16.msra.mxu0 0
        %2207 = vmatprep.subr.bf16.mxu0 0
        %2208 = vmatpush1.bf16.msra.mxu0 0
        %2209 = vmatprep.subr.bf16.mxu0 0
        %2210 = vmatpush1.bf16.msra.mxu0 0
        %2211 = vmatprep.subr.bf16.mxu0 0
        %2212 = vmatpush1.bf16.msra.mxu0 0
        %2213 = vmatprep.subr.bf16.mxu0 0
        %2214 = vmatpush1.bf16.msra.mxu0 0
        %2215 = vmatprep.subr.bf16.mxu0 0
        %2216 = vmatpush1.bf16.msra.mxu0 0
        %2217 = vmatprep.mubr.bf16.mxu0 0
        %2218 = vmatmul.mubr.bf16.gmra.mrb[0].mxu0 %v1410
        %v2219 = vpop.f32.mrb[0].mxu0
        %v2220 = vadd.f32 %v2107, %v2219
        %v2221 = vpop.f32.mrb[0].mxu0
        %v2222 = vadd.f32 %v2109, %v2221
        %v2223 = vpop.f32.mrb[0].mxu0
        %v2224 = vadd.f32 %v2111, %v2223
        %v2225 = vpop.f32.mrb[0].mxu0
        %v2226 = vadd.f32 %v2113, %v2225
        %2227 = vmatprep.mubr.bf16.mxu0 0
        %2228 = vmatmul.mubr.bf16.gmra.mrb[0].mxu0 %v1413
        %v2229 = vpop.f32.mrb[0].mxu0
        %v2230 = vadd.f32 %v2117, %v2229
        %v2231 = vpop.f32.mrb[0].mxu0
        %v2232 = vadd.f32 %v2119, %v2231
        %v2233 = vpop.f32.mrb[0].mxu0
        %v2234 = vadd.f32 %v2121, %v2233
        %v2235 = vpop.f32.mrb[0].mxu0
        %v2236 = vadd.f32 %v2123, %v2235
        %2237 = vmatprep.mubr.bf16.mxu0 0
        %2238 = vmatmul.mubr.bf16.gmra.mrb[0].mxu0 %v1416
        %v2239 = vpop.f32.mrb[0].mxu0
        %v2240 = vadd.f32 %v2127, %v2239
        %v2241 = vpop.f32.mrb[0].mxu0
        %v2242 = vadd.f32 %v2129, %v2241
        %v2243 = vpop.f32.mrb[0].mxu0
        %v2244 = vadd.f32 %v2131, %v2243
        %v2245 = vpop.f32.mrb[0].mxu0
        %v2246 = vadd.f32 %v2133, %v2245
        %2247 = vmatprep.mubr.bf16.mxu0 0
        %2248 = vmatmul.mubr.bf16.gmra.mrb[0].mxu0 %v1419
        %v2249 = vpop.f32.mrb[0].mxu0
        %v2250 = vadd.f32 %v2137, %v2249
        %v2251 = vpop.f32.mrb[0].mxu0
        %v2252 = vadd.f32 %v2139, %v2251
        %v2253 = vpop.f32.mrb[0].mxu0
        %v2254 = vadd.f32 %v2141, %v2253
        %v2255 = vpop.f32.mrb[0].mxu0
        %v2256 = vadd.f32 %v2143, %v2255
        %2257 = vmatprep.mubr.bf16.mxu0 0
        %2258 = vmatmul.mubr.bf16.gmra.mrb[0].mxu0 %v1422
        %v2259 = vpop.f32.mrb[0].mxu0
        %v2260 = vadd.f32 %v2147, %v2259
        %v2261 = vpop.f32.mrb[0].mxu0
        %v2262 = vadd.f32 %v2149, %v2261
        %v2263 = vpop.f32.mrb[0].mxu0
        %v2264 = vadd.f32 %v2151, %v2263
        %v2265 = vpop.f32.mrb[0].mxu0
        %v2266 = vadd.f32 %v2153, %v2265
        %2267 = vmatprep.mubr.bf16.mxu0 0
        %2268 = vmatmul.mubr.bf16.gmra.mrb[0].mxu0 %v1425
        %v2269 = vpop.f32.mrb[0].mxu0
        %v2270 = vadd.f32 %v2157, %v2269
        %v2271 = vpop.f32.mrb[0].mxu0
        %v2272 = vadd.f32 %v2159, %v2271
        %v2273 = vpop.f32.mrb[0].mxu0
        %v2274 = vadd.f32 %v2161, %v2273
        %v2275 = vpop.f32.mrb[0].mxu0
        %v2276 = vadd.f32 %v2163, %v2275
        %2277 = vmatprep.mubr.bf16.mxu0 0
        %2278 = vmatmul.mubr.bf16.gmra.mrb[0].mxu0 %v1428
        %v2279 = vpop.f32.mrb[0].mxu0
        %v2280 = vadd.f32 %v2167, %v2279
        %v2281 = vpop.f32.mrb[0].mxu0
        %v2282 = vadd.f32 %v2169, %v2281
        %v2283 = vpop.f32.mrb[0].mxu0
        %v2284 = vadd.f32 %v2171, %v2283
        %v2285 = vpop.f32.mrb[0].mxu0
        %v2286 = vadd.f32 %v2173, %v2285
        %2287 = vmatprep.mubr.bf16.mxu0 0
        %2288 = vmatmul.mubr.bf16.gmra.mrb[0].mxu0 %v1431
        %v2289 = vpop.f32.mrb[0].mxu0
        %v2290 = vadd.f32 %v2177, %v2289
        %v2291 = vpop.f32.mrb[0].mxu0
        %v2292 = vadd.f32 %v2179, %v2291
        %v2293 = vpop.f32.mrb[0].mxu0
        %v2294 = vadd.f32 %v2181, %v2293
        %v2295 = vpop.f32.mrb[0].mxu0
        %v2296 = vadd.f32 %v2183, %v2295
        %2297 = vdwg.mxu0
        %2298 = vmatprep.subr.bf16.mxu0 %v1883
        %2299 = vmatpush1.bf16.msra.mxu0 %v1882
        %2300 = vmatprep.subr.bf16.mxu0 %v1887
        %2301 = vmatpush1.bf16.msra.mxu0 %v1886
        %2302 = vmatprep.subr.bf16.mxu0 %v1891
        %2303 = vmatpush1.bf16.msra.mxu0 %v1890
        %2304 = vmatprep.subr.bf16.mxu0 %v1895
        %2305 = vmatpush1.bf16.msra.mxu0 %v1894
        %2306 = vmatprep.subr.bf16.mxu0 %v1899
        %2307 = vmatpush1.bf16.msra.mxu0 %v1898
        %2308 = vmatprep.subr.bf16.mxu0 %v1903
        %2309 = vmatpush1.bf16.msra.mxu0 %v1902
        %2310 = vmatprep.subr.bf16.mxu0 %v1907
        %2311 = vmatpush1.bf16.msra.mxu0 %v1906
        %2312 = vmatprep.subr.bf16.mxu0 %v1911
        %2313 = vmatpush1.bf16.msra.mxu0 %v1910
        %2314 = vmatprep.subr.bf16.mxu0 %v1915
        %2315 = vmatpush1.bf16.msra.mxu0 %v1914
        %2316 = vmatprep.subr.bf16.mxu0 %v1919
        %2317 = vmatpush1.bf16.msra.mxu0 %v1918
        %2318 = vmatprep.subr.bf16.mxu0 %v1923
        %2319 = vmatpush1.bf16.msra.mxu0 %v1922
        %2320 = vmatprep.subr.bf16.mxu0 %v1927
        %2321 = vmatpush1.bf16.msra.mxu0 %v1926
        %2322 = vmatprep.subr.bf16.mxu0 %v1931
        %2323 = vmatpush1.bf16.msra.mxu0 %v1930
        %2324 = vmatprep.subr.bf16.mxu0 %v1935
        %2325 = vmatpush1.bf16.msra.mxu0 %v1934
        %2326 = vmatprep.subr.bf16.mxu0 %v1939
        %2327 = vmatpush1.bf16.msra.mxu0 %v1938
        %2328 = vmatprep.subr.bf16.mxu0 %v1943
        %2329 = vmatpush1.bf16.msra.mxu0 %v1942
        %2330 = vmatprep.mubr.bf16.mxu0 %v1409
        %2331 = vmatmul.mubr.bf16.gmra.mrb[0].mxu0 %v1408
        %v2332 = vpop.f32.mrb[0].mxu0
        %v2333 = vadd.f32 %v1530, %v2332
        %v2334 = vpop.f32.mrb[0].mxu0
        %v2335 = vadd.f32 %v1531, %v2334
        %v2336 = vpop.f32.mrb[0].mxu0
        %v2337 = vadd.f32 %v1534, %v2336
        %v2338 = vpop.f32.mrb[0].mxu0
        %v2339 = vadd.f32 %v1535, %v2338
        %2340 = vmatprep.mubr.bf16.mxu0 %v1412
        %2341 = vmatmul.mubr.bf16.gmra.mrb[0].mxu0 %v1411
        %v2342 = vpop.f32.mrb[0].mxu0
        %v2343 = vadd.f32 %v1538, %v2342
        %v2344 = vpop.f32.mrb[0].mxu0
        %v2345 = vadd.f32 %v1539, %v2344
        %v2346 = vpop.f32.mrb[0].mxu0
        %v2347 = vadd.f32 %v1542, %v2346
        %v2348 = vpop.f32.mrb[0].mxu0
        %v2349 = vadd.f32 %v1543, %v2348
        %2350 = vmatprep.mubr.bf16.mxu0 %v1415
        %2351 = vmatmul.mubr.bf16.gmra.mrb[0].mxu0 %v1414
        %v2352 = vpop.f32.mrb[0].mxu0
        %v2353 = vadd.f32 %v1546, %v2352
        %v2354 = vpop.f32.mrb[0].mxu0
        %v2355 = vadd.f32 %v1547, %v2354
        %v2356 = vpop.f32.mrb[0].mxu0
        %v2357 = vadd.f32 %v1550, %v2356
        %v2358 = vpop.f32.mrb[0].mxu0
        %v2359 = vadd.f32 %v1551, %v2358
        %2360 = vmatprep.mubr.bf16.mxu0 %v1418
        %2361 = vmatmul.mubr.bf16.gmra.mrb[0].mxu0 %v1417
        %v2362 = vpop.f32.mrb[0].mxu0
        %v2363 = vadd.f32 %v1554, %v2362
        %v2364 = vpop.f32.mrb[0].mxu0
        %v2365 = vadd.f32 %v1555, %v2364
        %v2366 = vpop.f32.mrb[0].mxu0
        %v2367 = vadd.f32 %v1558, %v2366
        %v2368 = vpop.f32.mrb[0].mxu0
        %v2369 = vadd.f32 %v1559, %v2368
        %2370 = vmatprep.mubr.bf16.mxu0 %v1421
        %2371 = vmatmul.mubr.bf16.gmra.mrb[0].mxu0 %v1420
        %v2372 = vpop.f32.mrb[0].mxu0
        %v2373 = vadd.f32 %v1562, %v2372
        %v2374 = vpop.f32.mrb[0].mxu0
        %v2375 = vadd.f32 %v1563, %v2374
        %v2376 = vpop.f32.mrb[0].mxu0
        %v2377 = vadd.f32 %v1566, %v2376
        %v2378 = vpop.f32.mrb[0].mxu0
        %v2379 = vadd.f32 %v1567, %v2378
        %2380 = vmatprep.mubr.bf16.mxu0 %v1424
        %2381 = vmatmul.mubr.bf16.gmra.mrb[0].mxu0 %v1423
        %v2382 = vpop.f32.mrb[0].mxu0
        %v2383 = vadd.f32 %v1570, %v2382
        %v2384 = vpop.f32.mrb[0].mxu0
        %v2385 = vadd.f32 %v1571, %v2384
        %v2386 = vpop.f32.mrb[0].mxu0
        %v2387 = vadd.f32 %v1574, %v2386
        %v2388 = vpop.f32.mrb[0].mxu0
        %v2389 = vadd.f32 %v1575, %v2388
        %2390 = vmatprep.mubr.bf16.mxu0 %v1427
        %2391 = vmatmul.mubr.bf16.gmra.mrb[0].mxu0 %v1426
        %v2392 = vpop.f32.mrb[0].mxu0
        %v2393 = vadd.f32 %v1578, %v2392
        %v2394 = vpop.f32.mrb[0].mxu0
        %v2395 = vadd.f32 %v1579, %v2394
        %v2396 = vpop.f32.mrb[0].mxu0
        %v2397 = vadd.f32 %v1582, %v2396
        %v2398 = vpop.f32.mrb[0].mxu0
        %v2399 = vadd.f32 %v1583, %v2398
        %2400 = vmatprep.mubr.bf16.mxu0 %v1430
        %2401 = vmatmul.mubr.bf16.gmra.mrb[0].mxu0 %v1429
        %v2402 = vpop.f32.mrb[0].mxu0
        %v2403 = vadd.f32 %v1586, %v2402
        %v2404 = vpop.f32.mrb[0].mxu0
        %v2405 = vadd.f32 %v1587, %v2404
        %v2406 = vpop.f32.mrb[0].mxu0
        %v2407 = vadd.f32 %v1590, %v2406
        %v2408 = vpop.f32.mrb[0].mxu0
        %v2409 = vadd.f32 %v1591, %v2408
        %2410 = vdwg.mxu0
        %2411 = vmatprep.subr.bf16.mxu0 %v1947
        %2412 = vmatpush1.bf16.msra.mxu0 %v1946
        %2413 = vmatprep.subr.bf16.mxu0 %v1951
        %2414 = vmatpush1.bf16.msra.mxu0 %v1950
        %2415 = vmatprep.subr.bf16.mxu0 %v1955
        %2416 = vmatpush1.bf16.msra.mxu0 %v1954
        %2417 = vmatprep.subr.bf16.mxu0 %v1959
        %2418 = vmatpush1.bf16.msra.mxu0 %v1958
        %2419 = vmatprep.subr.bf16.mxu0 %v1963
        %2420 = vmatpush1.bf16.msra.mxu0 %v1962
        %2421 = vmatprep.subr.bf16.mxu0 %v1967
        %2422 = vmatpush1.bf16.msra.mxu0 %v1966
        %2423 = vmatprep.subr.bf16.mxu0 %v1971
        %2424 = vmatpush1.bf16.msra.mxu0 %v1970
        %2425 = vmatprep.subr.bf16.mxu0 %v1975
        %2426 = vmatpush1.bf16.msra.mxu0 %v1974
        %2427 = vmatprep.subr.bf16.mxu0 0
        %2428 = vmatpush1.bf16.msra.mxu0 0
        %2429 = vmatprep.subr.bf16.mxu0 0
        %2430 = vmatpush1.bf16.msra.mxu0 0
        %2431 = vmatprep.subr.bf16.mxu0 0
        %2432 = vmatpush1.bf16.msra.mxu0 0
        %2433 = vmatprep.subr.bf16.mxu0 0
        %2434 = vmatpush1.bf16.msra.mxu0 0
        %2435 = vmatprep.subr.bf16.mxu0 0
        %2436 = vmatpush1.bf16.msra.mxu0 0
        %2437 = vmatprep.subr.bf16.mxu0 0
        %2438 = vmatpush1.bf16.msra.mxu0 0
        %2439 = vmatprep.subr.bf16.mxu0 0
        %2440 = vmatpush1.bf16.msra.mxu0 0
        %2441 = vmatprep.subr.bf16.mxu0 0
        %2442 = vmatpush1.bf16.msra.mxu0 0
        %2443 = vmatprep.mubr.bf16.mxu0 0
        %2444 = vmatmul.mubr.bf16.gmra.mrb[0].mxu0 %v1410
        %v2445 = vpop.f32.mrb[0].mxu0
        %v2446 = vadd.f32 %v2333, %v2445
        %v2447 = vpop.f32.mrb[0].mxu0
        %v2448 = vadd.f32 %v2335, %v2447
        %v2449 = vpop.f32.mrb[0].mxu0
        %v2450 = vadd.f32 %v2337, %v2449
        %v2451 = vpop.f32.mrb[0].mxu0
        %v2452 = vadd.f32 %v2339, %v2451
        %2453 = vmatprep.mubr.bf16.mxu0 0
        %2454 = vmatmul.mubr.bf16.gmra.mrb[0].mxu0 %v1413
        %v2455 = vpop.f32.mrb[0].mxu0
        %v2456 = vadd.f32 %v2343, %v2455
        %v2457 = vpop.f32.mrb[0].mxu0
        %v2458 = vadd.f32 %v2345, %v2457
        %v2459 = vpop.f32.mrb[0].mxu0
        %v2460 = vadd.f32 %v2347, %v2459
        %v2461 = vpop.f32.mrb[0].mxu0
        %v2462 = vadd.f32 %v2349, %v2461
        %2463 = vmatprep.mubr.bf16.mxu0 0
        %2464 = vmatmul.mubr.bf16.gmra.mrb[0].mxu0 %v1416
        %v2465 = vpop.f32.mrb[0].mxu0
        %v2466 = vadd.f32 %v2353, %v2465
        %v2467 = vpop.f32.mrb[0].mxu0
        %v2468 = vadd.f32 %v2355, %v2467
        %v2469 = vpop.f32.mrb[0].mxu0
        %v2470 = vadd.f32 %v2357, %v2469
        %v2471 = vpop.f32.mrb[0].mxu0
        %v2472 = vadd.f32 %v2359, %v2471
        %2473 = vmatprep.mubr.bf16.mxu0 0
        %2474 = vmatmul.mubr.bf16.gmra.mrb[0].mxu0 %v1419
        %v2475 = vpop.f32.mrb[0].mxu0
        %v2476 = vadd.f32 %v2363, %v2475
        %v2477 = vpop.f32.mrb[0].mxu0
        %v2478 = vadd.f32 %v2365, %v2477
        %v2479 = vpop.f32.mrb[0].mxu0
        %v2480 = vadd.f32 %v2367, %v2479
        %v2481 = vpop.f32.mrb[0].mxu0
        %v2482 = vadd.f32 %v2369, %v2481
        %2483 = vmatprep.mubr.bf16.mxu0 0
        %2484 = vmatmul.mubr.bf16.gmra.mrb[0].mxu0 %v1422
        %v2485 = vpop.f32.mrb[0].mxu0
        %v2486 = vadd.f32 %v2373, %v2485
        %v2487 = vpop.f32.mrb[0].mxu0
        %v2488 = vadd.f32 %v2375, %v2487
        %v2489 = vpop.f32.mrb[0].mxu0
        %v2490 = vadd.f32 %v2377, %v2489
        %v2491 = vpop.f32.mrb[0].mxu0
        %v2492 = vadd.f32 %v2379, %v2491
        %2493 = vmatprep.mubr.bf16.mxu0 0
        %2494 = vmatmul.mubr.bf16.gmra.mrb[0].mxu0 %v1425
        %v2495 = vpop.f32.mrb[0].mxu0
        %v2496 = vadd.f32 %v2383, %v2495
        %v2497 = vpop.f32.mrb[0].mxu0
        %v2498 = vadd.f32 %v2385, %v2497
        %v2499 = vpop.f32.mrb[0].mxu0
        %v2500 = vadd.f32 %v2387, %v2499
        %v2501 = vpop.f32.mrb[0].mxu0
        %v2502 = vadd.f32 %v2389, %v2501
        %2503 = vmatprep.mubr.bf16.mxu0 0
        %2504 = vmatmul.mubr.bf16.gmra.mrb[0].mxu0 %v1428
        %v2505 = vpop.f32.mrb[0].mxu0
        %v2506 = vadd.f32 %v2393, %v2505
        %v2507 = vpop.f32.mrb[0].mxu0
        %v2508 = vadd.f32 %v2395, %v2507
        %v2509 = vpop.f32.mrb[0].mxu0
        %v2510 = vadd.f32 %v2397, %v2509
        %v2511 = vpop.f32.mrb[0].mxu0
        %v2512 = vadd.f32 %v2399, %v2511
        %2513 = vmatprep.mubr.bf16.mxu0 0
        %2514 = vmatmul.mubr.bf16.gmra.mrb[0].mxu0 %v1431
        %v2515 = vpop.f32.mrb[0].mxu0
        %v2516 = vadd.f32 %v2403, %v2515
        %v2517 = vpop.f32.mrb[0].mxu0
        %v2518 = vadd.f32 %v2405, %v2517
        %v2519 = vpop.f32.mrb[0].mxu0
        %v2520 = vadd.f32 %v2407, %v2519
        %v2521 = vpop.f32.mrb[0].mxu0
        %v2522 = vadd.f32 %v2409, %v2521
        %2523 = vdwg.mxu0
        %v2524 = vxor.u32 %v2220, 2147483648
        %v2525 = vxor.u32 %v2224, 2147483648
        %v2526 = vxor.u32 %v2230, 2147483648
        %v2527 = vxor.u32 %v2234, 2147483648
        %v2528 = vxor.u32 %v2240, 2147483648
        %v2529 = vxor.u32 %v2244, 2147483648
        %v2530 = vxor.u32 %v2250, 2147483648
        %v2531 = vxor.u32 %v2254, 2147483648
        %v2532 = vxor.u32 %v2260, 2147483648
        %v2533 = vxor.u32 %v2264, 2147483648
        %v2534 = vxor.u32 %v2270, 2147483648
        %v2535 = vxor.u32 %v2274, 2147483648
        %v2536 = vxor.u32 %v2280, 2147483648
        %v2537 = vxor.u32 %v2284, 2147483648
        %v2538 = vxor.u32 %v2290, 2147483648
        %v2539 = vxor.u32 %v2294, 2147483648
        %v2540 = vmul.f32 %v2524, 1.442695
        %v2541 = vpow.pop %v2540
        %v2542 = vmul.f32 %v2525, 1.442695
        %v2543 = vpow.pop %v2542
        %v2544 = vmul.f32 %v2526, 1.442695
        %v2545 = vpow.pop %v2544
        %v2546 = vmul.f32 %v2527, 1.442695
        %v2547 = vpow.pop %v2546
        %v2548 = vmul.f32 %v2528, 1.442695
        %v2549 = vpow.pop %v2548
        %v2550 = vmul.f32 %v2529, 1.442695
        %v2551 = vpow.pop %v2550
        %v2552 = vmul.f32 %v2530, 1.442695
        %v2553 = vpow.pop %v2552
        %v2554 = vmul.f32 %v2531, 1.442695
        %v2555 = vpow.pop %v2554
        %v2556 = vmul.f32 %v2532, 1.442695
        %v2557 = vpow.pop %v2556
        %v2558 = vmul.f32 %v2533, 1.442695
        %v2559 = vpow.pop %v2558
        %v2560 = vmul.f32 %v2534, 1.442695
        %v2561 = vpow.pop %v2560
        %v2562 = vmul.f32 %v2535, 1.442695
        %v2563 = vpow.pop %v2562
        %v2564 = vmul.f32 %v2536, 1.442695
        %v2565 = vpow.pop %v2564
        %v2566 = vmul.f32 %v2537, 1.442695
        %v2567 = vpow.pop %v2566
        %v2568 = vmul.f32 %v2538, 1.442695
        %v2569 = vpow.pop %v2568
        %v2570 = vmul.f32 %v2539, 1.442695
        %v2571 = vpow.pop %v2570
        %v2572 = vadd.f32 %v2541, 1.0
        %v2573 = vadd.f32 %v2543, 1.0
        %v2574 = vadd.f32 %v2545, 1.0
        %v2575 = vadd.f32 %v2547, 1.0
        %v2576 = vadd.f32 %v2549, 1.0
        %v2577 = vadd.f32 %v2551, 1.0
        %v2578 = vadd.f32 %v2553, 1.0
        %v2579 = vadd.f32 %v2555, 1.0
        %v2580 = vadd.f32 %v2557, 1.0
        %v2581 = vadd.f32 %v2559, 1.0
        %v2582 = vadd.f32 %v2561, 1.0
        %v2583 = vadd.f32 %v2563, 1.0
        %v2584 = vadd.f32 %v2565, 1.0
        %v2585 = vadd.f32 %v2567, 1.0
        %v2586 = vadd.f32 %v2569, 1.0
        %v2587 = vadd.f32 %v2571, 1.0
        %v2588 = vrcp.pop %v2572
        %v2589 = vmul.f32 1.0, %v2588
        %v2590 = vrcp.pop %v2573
        %v2591 = vmul.f32 1.0, %v2590
        %v2592 = vrcp.pop %v2574
        %v2593 = vmul.f32 1.0, %v2592
        %v2594 = vrcp.pop %v2575
        %v2595 = vmul.f32 1.0, %v2594
        %v2596 = vrcp.pop %v2576
        %v2597 = vmul.f32 1.0, %v2596
        %v2598 = vrcp.pop %v2577
        %v2599 = vmul.f32 1.0, %v2598
        %v2600 = vrcp.pop %v2578
        %v2601 = vmul.f32 1.0, %v2600
        %v2602 = vrcp.pop %v2579
        %v2603 = vmul.f32 1.0, %v2602
        %v2604 = vrcp.pop %v2580
        %v2605 = vmul.f32 1.0, %v2604
        %v2606 = vrcp.pop %v2581
        %v2607 = vmul.f32 1.0, %v2606
        %v2608 = vrcp.pop %v2582
        %v2609 = vmul.f32 1.0, %v2608
        %v2610 = vrcp.pop %v2583
        %v2611 = vmul.f32 1.0, %v2610
        %v2612 = vrcp.pop %v2584
        %v2613 = vmul.f32 1.0, %v2612
        %v2614 = vrcp.pop %v2585
        %v2615 = vmul.f32 1.0, %v2614
        %v2616 = vrcp.pop %v2586
        %v2617 = vmul.f32 1.0, %v2616
        %v2618 = vrcp.pop %v2587
        %v2619 = vmul.f32 1.0, %v2618
        %v2620 = vxor.u32 %v2222, 2147483648
        %v2621 = vxor.u32 %v2226, 2147483648
        %v2622 = vxor.u32 %v2232, 2147483648
        %v2623 = vxor.u32 %v2236, 2147483648
        %v2624 = vxor.u32 %v2242, 2147483648
        %v2625 = vxor.u32 %v2246, 2147483648
        %v2626 = vxor.u32 %v2252, 2147483648
        %v2627 = vxor.u32 %v2256, 2147483648
        %v2628 = vxor.u32 %v2262, 2147483648
        %v2629 = vxor.u32 %v2266, 2147483648
        %v2630 = vxor.u32 %v2272, 2147483648
        %v2631 = vxor.u32 %v2276, 2147483648
        %v2632 = vxor.u32 %v2282, 2147483648
        %v2633 = vxor.u32 %v2286, 2147483648
        %v2634 = vxor.u32 %v2292, 2147483648
        %v2635 = vxor.u32 %v2296, 2147483648
        %v2636 = vmul.f32 %v2620, 1.442695
        %v2637 = vpow.pop %v2636
        %v2638 = vmul.f32 %v2621, 1.442695
        %v2639 = vpow.pop %v2638
        %v2640 = vmul.f32 %v2622, 1.442695
        %v2641 = vpow.pop %v2640
        %v2642 = vmul.f32 %v2623, 1.442695
        %v2643 = vpow.pop %v2642
        %v2644 = vmul.f32 %v2624, 1.442695
        %v2645 = vpow.pop %v2644
        %v2646 = vmul.f32 %v2625, 1.442695
        %v2647 = vpow.pop %v2646
        %v2648 = vmul.f32 %v2626, 1.442695
        %v2649 = vpow.pop %v2648
        %v2650 = vmul.f32 %v2627, 1.442695
        %v2651 = vpow.pop %v2650
        %v2652 = vmul.f32 %v2628, 1.442695
        %v2653 = vpow.pop %v2652
        %v2654 = vmul.f32 %v2629, 1.442695
        %v2655 = vpow.pop %v2654
        %v2656 = vmul.f32 %v2630, 1.442695
        %v2657 = vpow.pop %v2656
        %v2658 = vmul.f32 %v2631, 1.442695
        %v2659 = vpow.pop %v2658
        %v2660 = vmul.f32 %v2632, 1.442695
        %v2661 = vpow.pop %v2660
        %v2662 = vmul.f32 %v2633, 1.442695
        %v2663 = vpow.pop %v2662
        %v2664 = vmul.f32 %v2634, 1.442695
        %v2665 = vpow.pop %v2664
        %v2666 = vmul.f32 %v2635, 1.442695
        %v2667 = vpow.pop %v2666
        %v2668 = vadd.f32 %v2637, 1.0
        %v2669 = vadd.f32 %v2639, 1.0
        %v2670 = vadd.f32 %v2641, 1.0
        %v2671 = vadd.f32 %v2643, 1.0
        %v2672 = vadd.f32 %v2645, 1.0
        %v2673 = vadd.f32 %v2647, 1.0
        %v2674 = vadd.f32 %v2649, 1.0
        %v2675 = vadd.f32 %v2651, 1.0
        %v2676 = vadd.f32 %v2653, 1.0
        %v2677 = vadd.f32 %v2655, 1.0
        %v2678 = vadd.f32 %v2657, 1.0
        %v2679 = vadd.f32 %v2659, 1.0
        %v2680 = vadd.f32 %v2661, 1.0
        %v2681 = vadd.f32 %v2663, 1.0
        %v2682 = vadd.f32 %v2665, 1.0
        %v2683 = vadd.f32 %v2667, 1.0
        %v2684 = vrcp.pop %v2668
        %v2685 = vmul.f32 1.0, %v2684
        %v2686 = vrcp.pop %v2669
        %v2687 = vmul.f32 1.0, %v2686
        %v2688 = vrcp.pop %v2670
        %v2689 = vmul.f32 1.0, %v2688
        %v2690 = vrcp.pop %v2671
        %v2691 = vmul.f32 1.0, %v2690
        %v2692 = vrcp.pop %v2672
        %v2693 = vmul.f32 1.0, %v2692
        %v2694 = vrcp.pop %v2673
        %v2695 = vmul.f32 1.0, %v2694
        %v2696 = vrcp.pop %v2674
        %v2697 = vmul.f32 1.0, %v2696
        %v2698 = vrcp.pop %v2675
        %v2699 = vmul.f32 1.0, %v2698
        %v2700 = vrcp.pop %v2676
        %v2701 = vmul.f32 1.0, %v2700
        %v2702 = vrcp.pop %v2677
        %v2703 = vmul.f32 1.0, %v2702
        %v2704 = vrcp.pop %v2678
        %v2705 = vmul.f32 1.0, %v2704
        %v2706 = vrcp.pop %v2679
        %v2707 = vmul.f32 1.0, %v2706
        %v2708 = vrcp.pop %v2680
        %v2709 = vmul.f32 1.0, %v2708
        %v2710 = vrcp.pop %v2681
        %v2711 = vmul.f32 1.0, %v2710
        %v2712 = vrcp.pop %v2682
        %v2713 = vmul.f32 1.0, %v2712
        %v2714 = vrcp.pop %v2683
        %v2715 = vmul.f32 1.0, %v2714
        %v2716 = vxor.u32 %v2446, 2147483648
        %v2717 = vxor.u32 %v2450, 2147483648
        %v2718 = vxor.u32 %v2456, 2147483648
        %v2719 = vxor.u32 %v2460, 2147483648
        %v2720 = vxor.u32 %v2466, 2147483648
        %v2721 = vxor.u32 %v2470, 2147483648
        %v2722 = vxor.u32 %v2476, 2147483648
        %v2723 = vxor.u32 %v2480, 2147483648
        %v2724 = vxor.u32 %v2486, 2147483648
        %v2725 = vxor.u32 %v2490, 2147483648
        %v2726 = vxor.u32 %v2496, 2147483648
        %v2727 = vxor.u32 %v2500, 2147483648
        %v2728 = vxor.u32 %v2506, 2147483648
        %v2729 = vxor.u32 %v2510, 2147483648
        %v2730 = vxor.u32 %v2516, 2147483648
        %v2731 = vxor.u32 %v2520, 2147483648
        %v2732 = vmul.f32 %v2716, 1.442695
        %v2733 = vpow.pop %v2732
        %v2734 = vmul.f32 %v2717, 1.442695
        %v2735 = vpow.pop %v2734
        %v2736 = vmul.f32 %v2718, 1.442695
        %v2737 = vpow.pop %v2736
        %v2738 = vmul.f32 %v2719, 1.442695
        %v2739 = vpow.pop %v2738
        %v2740 = vmul.f32 %v2720, 1.442695
        %v2741 = vpow.pop %v2740
        %v2742 = vmul.f32 %v2721, 1.442695
        %v2743 = vpow.pop %v2742
        %v2744 = vmul.f32 %v2722, 1.442695
        %v2745 = vpow.pop %v2744
        %v2746 = vmul.f32 %v2723, 1.442695
        %v2747 = vpow.pop %v2746
        %v2748 = vmul.f32 %v2724, 1.442695
        %v2749 = vpow.pop %v2748
        %v2750 = vmul.f32 %v2725, 1.442695
        %v2751 = vpow.pop %v2750
        %v2752 = vmul.f32 %v2726, 1.442695
        %v2753 = vpow.pop %v2752
        %v2754 = vmul.f32 %v2727, 1.442695
        %v2755 = vpow.pop %v2754
        %v2756 = vmul.f32 %v2728, 1.442695
        %v2757 = vpow.pop %v2756
        %v2758 = vmul.f32 %v2729, 1.442695
        %v2759 = vpow.pop %v2758
        %v2760 = vmul.f32 %v2730, 1.442695
        %v2761 = vpow.pop %v2760
        %v2762 = vmul.f32 %v2731, 1.442695
        %v2763 = vpow.pop %v2762
        %v2764 = vadd.f32 %v2733, 1.0
        %v2765 = vadd.f32 %v2735, 1.0
        %v2766 = vadd.f32 %v2737, 1.0
        %v2767 = vadd.f32 %v2739, 1.0
        %v2768 = vadd.f32 %v2741, 1.0
        %v2769 = vadd.f32 %v2743, 1.0
        %v2770 = vadd.f32 %v2745, 1.0
        %v2771 = vadd.f32 %v2747, 1.0
        %v2772 = vadd.f32 %v2749, 1.0
        %v2773 = vadd.f32 %v2751, 1.0
        %v2774 = vadd.f32 %v2753, 1.0
        %v2775 = vadd.f32 %v2755, 1.0
        %v2776 = vadd.f32 %v2757, 1.0
        %v2777 = vadd.f32 %v2759, 1.0
        %v2778 = vadd.f32 %v2761, 1.0
        %v2779 = vadd.f32 %v2763, 1.0
        %v2780 = vrcp.pop %v2764
        %v2781 = vmul.f32 1.0, %v2780
        %v2782 = vrcp.pop %v2765
        %v2783 = vmul.f32 1.0, %v2782
        %v2784 = vrcp.pop %v2766
        %v2785 = vmul.f32 1.0, %v2784
        %v2786 = vrcp.pop %v2767
        %v2787 = vmul.f32 1.0, %v2786
        %v2788 = vrcp.pop %v2768
        %v2789 = vmul.f32 1.0, %v2788
        %v2790 = vrcp.pop %v2769
        %v2791 = vmul.f32 1.0, %v2790
        %v2792 = vrcp.pop %v2770
        %v2793 = vmul.f32 1.0, %v2792
        %v2794 = vrcp.pop %v2771
        %v2795 = vmul.f32 1.0, %v2794
        %v2796 = vrcp.pop %v2772
        %v2797 = vmul.f32 1.0, %v2796
        %v2798 = vrcp.pop %v2773
        %v2799 = vmul.f32 1.0, %v2798
        %v2800 = vrcp.pop %v2774
        %v2801 = vmul.f32 1.0, %v2800
        %v2802 = vrcp.pop %v2775
        %v2803 = vmul.f32 1.0, %v2802
        %v2804 = vrcp.pop %v2776
        %v2805 = vmul.f32 1.0, %v2804
        %v2806 = vrcp.pop %v2777
        %v2807 = vmul.f32 1.0, %v2806
        %v2808 = vrcp.pop %v2778
        %v2809 = vmul.f32 1.0, %v2808
        %v2810 = vrcp.pop %v2779
        %v2811 = vmul.f32 1.0, %v2810
        %v2812 = vtanh.pop %v2448
        %v2813 = vtanh.pop %v2452
        %v2814 = vtanh.pop %v2458
        %v2815 = vtanh.pop %v2462
        %v2816 = vtanh.pop %v2468
        %v2817 = vtanh.pop %v2472
        %v2818 = vtanh.pop %v2478
        %v2819 = vtanh.pop %v2482
        %v2820 = vtanh.pop %v2488
        %v2821 = vtanh.pop %v2492
        %v2822 = vtanh.pop %v2498
        %v2823 = vtanh.pop %v2502
        %v2824 = vtanh.pop %v2508
        %v2825 = vtanh.pop %v2512
        %v2826 = vtanh.pop %v2518
        %v2827 = vtanh.pop %v2522
        %v2828 = vmul.f32 %v2589, %v708
        %v2829 = vmul.f32 %v2591, %v709
        %v2830 = vmul.f32 %v2593, %v710
        %v2831 = vmul.f32 %v2595, %v711
        %v2832 = vmul.f32 %v2597, %v712
        %v2833 = vmul.f32 %v2599, %v713
        %v2834 = vmul.f32 %v2601, %v714
        %v2835 = vmul.f32 %v2603, %v715
        %v2836 = vmul.f32 %v2605, %v716
        %v2837 = vmul.f32 %v2607, %v717
        %v2838 = vmul.f32 %v2609, %v718
        %v2839 = vmul.f32 %v2611, %v719
        %v2840 = vmul.f32 %v2613, %v720
        %v2841 = vmul.f32 %v2615, %v721
        %v2842 = vmul.f32 %v2617, %v722
        %v2843 = vmul.f32 %v2619, %v723
        %v2844 = vmul.f32 %v2685, %v2812
        %v2845 = vmul.f32 %v2687, %v2813
        %v2846 = vmul.f32 %v2689, %v2814
        %v2847 = vmul.f32 %v2691, %v2815
        %v2848 = vmul.f32 %v2693, %v2816
        %v2849 = vmul.f32 %v2695, %v2817
        %v2850 = vmul.f32 %v2697, %v2818
        %v2851 = vmul.f32 %v2699, %v2819
        %v2852 = vmul.f32 %v2701, %v2820
        %v2853 = vmul.f32 %v2703, %v2821
        %v2854 = vmul.f32 %v2705, %v2822
        %v2855 = vmul.f32 %v2707, %v2823
        %v2856 = vmul.f32 %v2709, %v2824
        %v2857 = vmul.f32 %v2711, %v2825
        %v2858 = vmul.f32 %v2713, %v2826
        %v2859 = vmul.f32 %v2715, %v2827
        %v2860 = vadd.f32 %v2828, %v2844
        %v2861 = vadd.f32 %v2829, %v2845
        %v2862 = vadd.f32 %v2830, %v2846
        %v2863 = vadd.f32 %v2831, %v2847
        %v2864 = vadd.f32 %v2832, %v2848
        %v2865 = vadd.f32 %v2833, %v2849
        %v2866 = vadd.f32 %v2834, %v2850
        %v2867 = vadd.f32 %v2835, %v2851
        %v2868 = vadd.f32 %v2836, %v2852
        %v2869 = vadd.f32 %v2837, %v2853
        %v2870 = vadd.f32 %v2838, %v2854
        %v2871 = vadd.f32 %v2839, %v2855
        %v2872 = vadd.f32 %v2840, %v2856
        %v2873 = vadd.f32 %v2841, %v2857
        %v2874 = vadd.f32 %v2842, %v2858
        %v2875 = vadd.f32 %v2843, %v2859
        %v2876 = vtanh.pop %v2860
        %v2877 = vtanh.pop %v2861
        %v2878 = vtanh.pop %v2862
        %v2879 = vtanh.pop %v2863
        %v2880 = vtanh.pop %v2864
        %v2881 = vtanh.pop %v2865
        %v2882 = vtanh.pop %v2866
        %v2883 = vtanh.pop %v2867
        %v2884 = vtanh.pop %v2868
        %v2885 = vtanh.pop %v2869
        %v2886 = vtanh.pop %v2870
        %v2887 = vtanh.pop %v2871
        %v2888 = vtanh.pop %v2872
        %v2889 = vtanh.pop %v2873
        %v2890 = vtanh.pop %v2874
        %v2891 = vtanh.pop %v2875
        %v2892 = vmul.f32 %v2781, %v2876
        %v2893 = vmul.f32 %v2783, %v2877
        %v2894 = vmul.f32 %v2785, %v2878
        %v2895 = vmul.f32 %v2787, %v2879
        %v2896 = vmul.f32 %v2789, %v2880
        %v2897 = vmul.f32 %v2791, %v2881
        %v2898 = vmul.f32 %v2793, %v2882
        %v2899 = vmul.f32 %v2795, %v2883
        %v2900 = vmul.f32 %v2797, %v2884
        %v2901 = vmul.f32 %v2799, %v2885
        %v2902 = vmul.f32 %v2801, %v2886
        %v2903 = vmul.f32 %v2803, %v2887
        %v2904 = vmul.f32 %v2805, %v2888
        %v2905 = vmul.f32 %v2807, %v2889
        %v2906 = vmul.f32 %v2809, %v2890
        %v2907 = vmul.f32 %v2811, %v2891
        %2908 = vst [vmem:[%s428] sm:$0xff] %v2860
        %2909 = vst [vmem:[%s428 + $0x8] sm:$0xff] %v2861
        %2910 = vst [vmem:[%s428 + $0x10] sm:$0xff] %v2862
        %2911 = vst [vmem:[%s428 + $0x18] sm:$0xff] %v2863
        %2912 = vst [vmem:[%s428 + $0x20] sm:$0xff] %v2864
        %2913 = vst [vmem:[%s428 + $0x28] sm:$0xff] %v2865
        %2914 = vst [vmem:[%s428 + $0x30] sm:$0xff] %v2866
        %2915 = vst [vmem:[%s428 + $0x38] sm:$0xff] %v2867
        %2916 = vst [vmem:[%s428 + $0x40] sm:$0xff] %v2868
        %2917 = vst [vmem:[%s428 + $0x48] sm:$0xff] %v2869
        %2918 = vst [vmem:[%s428 + $0x50] sm:$0xff] %v2870
        %2919 = vst [vmem:[%s428 + $0x58] sm:$0xff] %v2871
        %2920 = vst [vmem:[%s428 + $0x60] sm:$0xff] %v2872
        %2921 = vst [vmem:[%s428 + $0x68] sm:$0xff] %v2873
        %2922 = vst [vmem:[%s428 + $0x70] sm:$0xff] %v2874
        %2923 = vst [vmem:[%s428 + $0x78] sm:$0xff] %v2875
        %2924 = vst [vmem:[%s421] sm:$0xff] %v2892
        %2925 = vst [vmem:[%s421 + $0x8] sm:$0xff] %v2893
        %2926 = vst [vmem:[%s421 + $0x10] sm:$0xff] %v2894
        %2927 = vst [vmem:[%s421 + $0x18] sm:$0xff] %v2895
        %2928 = vst [vmem:[%s421 + $0x20] sm:$0xff] %v2896
        %2929 = vst [vmem:[%s421 + $0x28] sm:$0xff] %v2897
        %2930 = vst [vmem:[%s421 + $0x30] sm:$0xff] %v2898
        %2931 = vst [vmem:[%s421 + $0x38] sm:$0xff] %v2899
        %2932 = vst [vmem:[%s421 + $0x40] sm:$0xff] %v2900
        %2933 = vst [vmem:[%s421 + $0x48] sm:$0xff] %v2901
        %2934 = vst [vmem:[%s421 + $0x50] sm:$0xff] %v2902
        %2935 = vst [vmem:[%s421 + $0x58] sm:$0xff] %v2903
        %2936 = vst [vmem:[%s421 + $0x60] sm:$0xff] %v2904
        %2937 = vst [vmem:[%s421 + $0x68] sm:$0xff] %v2905
        %2938 = vst [vmem:[%s421 + $0x70] sm:$0xff] %v2906
        %2939 = vst [vmem:[%s421 + $0x78] sm:$0xff] %v2907
        %s2940 = sand.u32 %s182, 1
        %s2941 = scalar_lea.sflag [#allocation4], %s2940
        %s2942 = sand.u32 %s182, 1
        %s2943 = smul.addr %s2942, 128
        %s2944 = scalar_lea.vmem [#allocation13], %s2943
        %s2945 = sand.u32 %s208, 1
        %s2946 = scalar_lea.sflag [#allocation15], %s2945
        %s2947 = sand.u32 %s208, 1
        %s2948 = smul.addr %s2947, 128
        %s2949 = scalar_lea.vmem [#allocation14], %s2948
        // Predicated region
        $region69: #{tpu_custom_call.1} parent=43 // pred_check
          %p2950 = pneg %p192
        $region70: #{tpu_custom_call.1} parent=43 // pred_check_branch
          %2952 = sbr.rel (%p2950) target = $region72
        $region71: #{tpu_custom_call.1} parent=43 // pred_region
          %s2953 = smul.u32 16, %s33
          %s2955 = ssub.s32 2048, 2048
          %2956 = vsyncadd %s2941, %s2955
          %s2957 = smul.addr %s2953, 128
          %s2958 = scalar_lea.hbm %s6, %s2957
          %s2959 = sshll.u32 %s2944, 4
          %s2960 = int_to_ptr.vmem [resolvable:$true] %s2959
          %2965 = dma.vmem_to_hbm [thread:$0]  %s2960, 2048, %s2958, %s2941, 128, 128, 8
        $region72: #{tpu_custom_call.1} parent=43 // pred_fallthru
          _
        // Predicated region
        $region73: #{tpu_custom_call.1} parent=43 // pred_check
          %p2966 = pneg %p218
        $region74: #{tpu_custom_call.1} parent=43 // pred_check_branch
          %2968 = sbr.rel (%p2966) target = $region76
        $region75: #{tpu_custom_call.1} parent=43 // pred_region
          %s2969 = smul.u32 16, %s33
          %s2971 = ssub.s32 2048, 2048
          %2972 = vsyncadd %s2946, %s2971
          %s2973 = smul.addr %s2969, 128
          %s2974 = scalar_lea.hbm %s7, %s2973
          %s2975 = sshll.u32 %s2949, 4
          %s2976 = int_to_ptr.vmem [resolvable:$true] %s2975
          %2981 = dma.vmem_to_hbm [thread:$0]  %s2976, 2048, %s2974, %s2946, 128, 128, 8
        $region76: #{tpu_custom_call.1} parent=43 // pred_fallthru
          _
      $region44: #{tpu_custom_call.1} parent=5 // pred_fallthru
        _
      %p2982 = scmp.le.s32.totalorder 2, %s28
      // Predicated region
      $region77: #{tpu_custom_call.1} parent=5 // pred_check
        %p2983 = pneg %p2982
      $region78: #{tpu_custom_call.1} parent=5 // pred_check_branch
        %2985 = sbr.rel (%p2983) target = $region80
      $region79: #{tpu_custom_call.1} parent=5 // pred_region
        %s2986 = ssub.s32 %s28, 2
        // Predicated region
        $region81: #{tpu_custom_call.1} parent=79 // pred_check
          %p2987 = pneg %p198
        $region82: #{tpu_custom_call.1} parent=79 // pred_check_branch
          %2989 = sbr.rel (%p2987) target = $region84
        $region83: #{tpu_custom_call.1} parent=79 // pred_region
          %s2990 = sand.u32 %s183, 1
          %s2991 = scalar_lea.sflag [#allocation4], %s2990
          %s2992 = sand.u32 %s183, 1
          %s2993 = smul.addr %s2992, 128
          %s2994 = scalar_lea.vmem [#allocation13], %s2993
          %2995 = dma.done %s2991, 2048
        $region84: #{tpu_custom_call.1} parent=79 // pred_fallthru
          _
        // Predicated region
        $region85: #{tpu_custom_call.1} parent=79 // pred_check
          %p2996 = pneg %p224
        $region86: #{tpu_custom_call.1} parent=79 // pred_check_branch
          %2998 = sbr.rel (%p2996) target = $region88
        $region87: #{tpu_custom_call.1} parent=79 // pred_region
          %s2999 = sand.u32 %s209, 1
          %s3000 = scalar_lea.sflag [#allocation15], %s2999
          %s3001 = sand.u32 %s209, 1
          %s3002 = smul.addr %s3001, 128
          %s3003 = scalar_lea.vmem [#allocation14], %s3002
          %3004 = dma.done %s3000, 2048
        $region88: #{tpu_custom_call.1} parent=79 // pred_fallthru
          _
      $region80: #{tpu_custom_call.1} parent=5 // pred_fallthru
        _
    $region6: #{tpu_custom_call.1} parent=1 // loop_footer
      %s32 = sadd.s32 1, %s28
    $region7: #{tpu_custom_call.1} parent=1 // loop_footer_branch
      %27 = sbr.rel target = $region3
    $region8: #{tpu_custom_call.1} parent=1 // loop_exit
      _
    %3005 = vsyncpa [#allocation3], 1
    %s3006 = scalar_lea.sflag [#allocation3], 1
    %3007 = vsyncpa %s3006, 1
    %3008 = vsyncpa [#allocation6], 1
    %s3009 = scalar_lea.sflag [#allocation6], 1
    %3010 = vsyncpa %s3009, 1
    %3011 = vsyncpa [#allocation9], 1
    %3012 = vsyncpa [#allocation12], 1
    %3013 = vsyncpa [#allocation4], 1
    %s3014 = scalar_lea.sflag [#allocation4], 1
    %3015 = vsyncpa %s3014, 1
    %3016 = vsyncpa [#allocation15], 1
    %s3017 = scalar_lea.sflag [#allocation15], 1
    %3018 = vsyncpa %s3017, 1

</llo_original>
